<compile_context>
chip_gen: v7x
topology: tpu7x:2x2x1
jax: 0.10.0
libtpu: 0.0.40
codegen_flags: <defaults>
</compile_context>

<pallas_src>
import jax
import jax.numpy as jnp
from jax.experimental import pallas as pl
from jax.experimental.pallas import tpu as pltpu

# ----------------------------- model dimensions -----------------------------
V = 256                     # mesh vertices (synthetic, small)
NUM_JOINTS = 52             # SMPL-H: 1 root + 21 body + 30 hand joints
P = 9 * (NUM_JOINTS - 1)    # pose-feature dim = 459
BATCH = 2

# kernel-side padded / tiled dims
P_PAD = 512                 # 459 -> 512 : lane-aligned K for blendshape matmul
J_PAD = 64                  # 52  -> 64  : aligned K for skinning matmul
TB = 8                      # batch elements per grid step (TB*12 = 96 MXU rows)


def _pad_axis(x, axis, target):
    pad = [(0, 0)] * x.ndim
    pad[axis] = (0, target - x.shape[axis])
    return jnp.pad(x, pad)


# ------------------------------- Pallas kernel -------------------------------
def lbs_kernel(pose_feat_ref, a_stack_ref, posedirs_ref, v_template_ref,
               weightsT_ref, out_ref):
    """Batched LBS for one tile of TB batch elements.

    pose_feat_ref : (TB, P_PAD)     bf16 pose features (R[1:]-I, zero-padded)
    a_stack_ref   : (TB*12, J_PAD)  f32; row k*(TB*3)+c*TB+b holds A[b,:,c,k]
                                    with global trans already folded into col 3
    posedirs_ref  : (P_PAD, 3*V)    bf16 fused pose-blendshape basis
    v_template_ref: (1, 3*V)        f32 template vertices, coord-major flat
    weightsT_ref  : (J_PAD, V)      f32 skinning weights^T (zero-padded joints)
    out_ref       : (TB*3, V)       f32 output vertices, row = c*TB + b
    """
    # fused pose-blendshape matmul:  (TB, P) @ (P, 3V) -> (TB, 3V), f32 acc
    vp = jnp.dot(pose_feat_ref[...], posedirs_ref[...],
                 preferred_element_type=jnp.float32)
    vp = vp + v_template_ref[...]                       # broadcast over TB rows

    # skinning transforms, batched in M:  (TB*12, J) @ (J, V) -> (TB*12, V)
    tt = jnp.dot(a_stack_ref[...], weightsT_ref[...],
                 preferred_element_type=jnp.float32)

    # component-major layout -> four sublane-aligned (TB*3, V) blocks
    R = TB * 3
    tx = tt[0 * R:1 * R, :]
    ty = tt[1 * R:2 * R, :]
    tz = tt[2 * R:3 * R, :]
    tw = tt[3 * R:4 * R, :]                              # carries trans too

    # coordinate blocks of vp, replicated 3x along sublanes (row = c*TB + b)
    vx = vp[:, 0 * V:1 * V]
    vy = vp[:, 1 * V:2 * V]
    vz = vp[:, 2 * V:3 * V]
    vx3 = jnp.concatenate([vx, vx, vx], axis=0)
    vy3 = jnp.concatenate([vy, vy, vy], axis=0)
    vz3 = jnp.concatenate([vz, vz, vz], axis=0)

    # dense FMA epilogue + single lane-dense store
    out_ref[...] = tx * vx3 + ty * vy3 + tz * vz3 + tw


@jax.jit
def lbs_pallas(pose_feat_p, a_stack, posedirs_flat, v_template_flat,
               weights_T_p):
    b_pad = pose_feat_p.shape[0]
    n_bt = b_pad // TB
    out = pl.pallas_call(
        lbs_kernel,
        out_shape=jax.ShapeDtypeStruct((b_pad * 3, V), jnp.float32),
        grid_spec=pltpu.PrefetchScalarGridSpec(
            num_scalar_prefetch=0,
            grid=(n_bt,),
            in_specs=[
                pl.BlockSpec((TB, P_PAD), lambda bt: (bt, 0)),        # pose feat
                pl.BlockSpec((TB * 12, J_PAD), lambda bt: (bt, 0)),   # A rows
                pl.BlockSpec((P_PAD, 3 * V), lambda bt: (0, 0)),      # posedirs
                pl.BlockSpec((1, 3 * V), lambda bt: (0, 0)),          # template
                pl.BlockSpec((J_PAD, V), lambda bt: (0, 0)),          # weights^T
            ],
            out_specs=pl.BlockSpec((TB * 3, V), lambda bt: (bt, 0)),
        ),
        compiler_params=pltpu.CompilerParams(
            dimension_semantics=("parallel",)),     # v7x: shard across 2 TCs
    )(pose_feat_p, a_stack, posedirs_flat, v_template_flat, weights_T_p)
    return out   # (B_pad*3, V), rows c-major / b-minor within each TB tile


# ------------------------------- JAX glue ------------------------------------
def rodrigues(aa):
    """Axis-angle (..., 3) -> rotation matrices (..., 3, 3)."""
    angle = jnp.linalg.norm(aa, axis=-1, keepdims=True)
    axis = aa / jnp.maximum(angle, 1e-8)
    x, y, z = axis[..., 0], axis[..., 1], axis[..., 2]
    zeros = jnp.zeros_like(x)
    K = jnp.stack([zeros, -z, y,
                   z, zeros, -x,
                   -y, x, zeros], axis=-1).reshape(aa.shape[:-1] + (3, 3))
    s = jnp.sin(angle)[..., None]
    c = jnp.cos(angle)[..., None]
    eye = jnp.eye(3, dtype=aa.dtype)
    return eye + s * K + (1.0 - c) * jnp.matmul(K, K)


def forward_kinematics(R, joints, parents):
    """R: (B, J, 3, 3), joints: (J, 3) rest pose -> A: (B, J, 4, 4)."""
    B = R.shape[0]
    Jn = joints.shape[0]
    rel = jnp.concatenate(
        [joints[:1], joints[1:] - joints[jnp.array(parents[1:])]], axis=0)
    bottom = jnp.broadcast_to(
        jnp.array([[0.0, 0.0, 0.0, 1.0]], dtype=R.dtype), (B, 1, 4))
    results = []
    for j in range(Jn):
        t = jnp.broadcast_to(rel[j][None, :, None], (B, 3, 1))
        Tl = jnp.concatenate(
            [jnp.concatenate([R[:, j], t], axis=-1), bottom], axis=-2)
        if j == 0:
            results.append(Tl)
        else:
            results.append(jnp.matmul(results[parents[j]], Tl))
    Tg = jnp.stack(results, axis=1)                                  # (B,J,4,4)
    jt = jnp.broadcast_to(joints[None, :, :, None], (B, Jn, 3, 1))
    corr = jnp.matmul(Tg[..., :3, :3], jt)[..., 0]                   # (B,J,3)
    A = Tg.at[..., :3, 3].add(-corr)
    return A


def body_model_forward(params, model):
    """Equivalent of BodyModel.forward(body_params) -> vertices (B, V, 3)."""
    root_orient = params["root_orient"]   # (B, 3)
    pose_body = params["pose_body"]       # (B, 63)
    pose_hand = params["pose_hand"]       # (B, 90)
    trans = params["trans"]               # (B, 3)
    B = root_orient.shape[0]

    full_pose = jnp.concatenate([root_orient, pose_body, pose_hand],
                                axis=-1).reshape(B, NUM_JOINTS, 3)
    R = rodrigues(full_pose)                                          # (B,J,3,3)
    pose_feat = (R[:, 1:] - jnp.eye(3, dtype=R.dtype)).reshape(B, P)  # (B, P)

    joints = model["J_regressor"] @ model["v_template"]               # (J, 3)
    A = forward_kinematics(R, joints, model["parents"])               # (B,J,4,4)

    # ---- kernel-friendly, padded layouts (zero padding; no pre-broadcast) ---
    b_pad = ((B + TB - 1) // TB) * TB
    n_bt = b_pad // TB

    # pose features: zero-pad to (b_pad, P_PAD), pre-cast to bf16 (host-side)
    pose_feat_p = _pad_axis(_pad_axis(pose_feat, 1, P_PAD),
                            0, b_pad).astype(jnp.bfloat16)

    # fold global translation into joint transforms (skinning weight rows sum
    # to 1 and padded joints are zero-weighted, so this is exact), then build
    # the component-major a_stack: row k*(TB*3) + c*TB + b holds A[b, :, c, k]
    A_t = A.at[:, :, :3, 3].add(trans[:, None, :])
    A_t = _pad_axis(_pad_axis(A_t, 0, b_pad), 1, J_PAD)       # (b_pad,J_PAD,4,4)
    a_stack = jnp.transpose(
        A_t[:, :, :3, :].reshape(n_bt, TB, J_PAD, 3, 4),      # (bt,b,j,c,k)
        (0, 4, 3, 1, 2)).reshape(n_bt * TB * 12, J_PAD)       # (bt,k,c,b) major

    posedirs_flat = jnp.transpose(model["posedirs"], (0, 2, 1)).reshape(P, 3 * V)
    posedirs_flat = _pad_axis(posedirs_flat, 0, P_PAD).astype(jnp.bfloat16)

    v_template_flat = model["v_template"].T.reshape(1, 3 * V)
    weights_T_p = _pad_axis(model["weights"].T, 0, J_PAD)              # (Jp, V)

    out = lbs_pallas(pose_feat_p, a_stack, posedirs_flat, v_template_flat,
                     weights_T_p)                                     # (Bp*3, V)
    # per-tile rows are (c, b)-ordered; transpose kept outside the kernel so
    # the kernel's store stays lane-dense (last dim V, not 3).
    verts = jnp.transpose(out.reshape(n_bt, 3, TB, V),
                          (0, 2, 3, 1)).reshape(b_pad, V, 3)[:B]
    return verts, (pose_feat, A)


def body_model_reference(pose_feat, A, trans, model):
    """Pure-JAX reference LBS for correctness checking.

    Uses the same bf16 quantization of the blendshape-matmul inputs as the
    kernel so the comparison isolates kernel structure (f32 accumulation both
    paths)."""
    B = pose_feat.shape[0]
    pf_q = pose_feat.astype(jnp.bfloat16).astype(jnp.float32)
    pd_q = model["posedirs"].astype(jnp.bfloat16).astype(jnp.float32)
    v_posed = model["v_template"][None] + jnp.einsum("bp,pvc->bvc", pf_q, pd_q)
    T = jnp.einsum("vj,bjrk->bvrk", model["weights"], A)              # (B,V,4,4)
    v_h = jnp.concatenate([v_posed, jnp.ones((B, V, 1), v_posed.dtype)], axis=-1)
    verts = jnp.einsum("bvrk,bvk->bvr", T, v_h)[..., :3] + trans[:, None, :]
    return verts


# ------------------------- synthetic model / inputs --------------------------
def make_synthetic_model(key):
    k1, k2, k3, k4 = jax.random.split(key, 4)
    v_template = 0.1 * jax.random.normal(k1, (V, 3), dtype=jnp.float32)
    posedirs = 0.01 * jax.random.normal(k2, (P, V, 3), dtype=jnp.float32)
    J_regressor = jax.nn.softmax(
        jax.random.normal(k3, (NUM_JOINTS, V), dtype=jnp.float32), axis=-1)
    weights = jax.nn.softmax(
        4.0 * jax.random.normal(k4, (V, NUM_JOINTS), dtype=jnp.float32), axis=-1)
    # synthetic kinematic tree (binary-tree shaped, parent index < child index)
    parents = [-1] + [(j - 1) // 2 for j in range(1, NUM_JOINTS)]
    return dict(v_template=v_template, posedirs=posedirs,
                J_regressor=J_regressor, weights=weights, parents=parents)


def make_body_params(key, batch):
    k1, k2, k3, k4 = jax.random.split(key, 4)
    return dict(
        root_orient=0.3 * jax.random.normal(k1, (batch, 3), dtype=jnp.float32),
        pose_body=0.3 * jax.random.normal(k2, (batch, 63), dtype=jnp.float32),
        pose_hand=0.3 * jax.random.normal(k3, (batch, 90), dtype=jnp.float32),
        trans=jax.random.normal(k4, (batch, 3), dtype=jnp.float32),
    )


if __name__ == "__main__":
    key = jax.random.PRNGKey(0)
    k_model, k_inputs = jax.random.split(key)

    model = make_synthetic_model(k_model)
    body_params = make_body_params(k_inputs, BATCH)

    verts, (pose_feat, A) = body_model_forward(body_params, model)
    verts = jax.block_until_ready(verts)

    verts_ref = body_model_reference(pose_feat, A, body_params["trans"], model)
    verts_ref = jax.block_until_ready(verts_ref)

    assert verts.shape == (BATCH, V, 3), verts.shape
    assert jnp.allclose(verts, verts_ref, atol=1e-3, rtol=1e-3), (
        float(jnp.max(jnp.abs(verts - verts_ref))))

    print("KERNEL_OK")
</pallas_src>

<mosaic_0001>
module attributes {stable_mosaic.version = 11 : i64} {
  func.func @lbs_kernel(%arg0: i32, %arg1: memref<8x512xbf16, #tpu.memory_space<vmem>>, %arg2: memref<96x64xf32, #tpu.memory_space<vmem>>, %arg3: memref<512x768xbf16, #tpu.memory_space<vmem>>, %arg4: memref<1x768xf32, #tpu.memory_space<vmem>>, %arg5: memref<64x256xf32, #tpu.memory_space<vmem>>, %arg6: memref<24x256xf32, #tpu.memory_space<vmem>>) attributes {dimension_semantics = [#tpu.dimension_semantics<parallel>], iteration_bounds = array<i64: 1>, scalar_prefetch = 0 : i64, scratch_operands = 0 : i64, tpu.core_type = #tpu.core_type<tc>, window_params = [{transform_indices = @transform_0, window_bounds = array<i64: 8, 512>}, {transform_indices = @transform_1, window_bounds = array<i64: 96, 64>}, {pipeline_mode = #tpu.pipeline_mode<synchronous>, transform_indices = @transform_2, window_bounds = array<i64: 512, 768>}, {pipeline_mode = #tpu.pipeline_mode<synchronous>, transform_indices = @transform_3, window_bounds = array<i64: 1, 768>}, {pipeline_mode = #tpu.pipeline_mode<synchronous>, transform_indices = @transform_4, window_bounds = array<i64: 64, 256>}, {transform_indices = @transform_5, window_bounds = array<i64: 24, 256>}]} {
    %c0 = arith.constant 0 : index
    %c0_0 = arith.constant 0 : index
    %0 = vector.load %arg1[%c0, %c0_0] : memref<8x512xbf16, #tpu.memory_space<vmem>>, vector<8x512xbf16>
    %c0_1 = arith.constant 0 : index
    %c0_2 = arith.constant 0 : index
    %1 = vector.load %arg3[%c0_1, %c0_2] : memref<512x768xbf16, #tpu.memory_space<vmem>>, vector<512x768xbf16>
    %cst = arith.constant dense<0.000000e+00> : vector<8x768xf32>
    %2 = tpu.matmul %0, %1, %cst {dimension_numbers = #tpu.dot_dimension_numbers<[1], [0], [0], [1], [0, 0, 1, 1], [], []>} : vector<8x512xbf16>, vector<512x768xbf16>, vector<8x768xf32> -> vector<8x768xf32>
    %c0_3 = arith.constant 0 : index
    %c0_4 = arith.constant 0 : index
    %3 = vector.load %arg4[%c0_3, %c0_4] : memref<1x768xf32, #tpu.memory_space<vmem>>, vector<1x768xf32>
    %4 = vector.broadcast %3 : vector<1x768xf32> to vector<8x768xf32>
    %5 = arith.addf %2, %4 : vector<8x768xf32>
    %c0_5 = arith.constant 0 : index
    %c0_6 = arith.constant 0 : index
    %6 = vector.load %arg2[%c0_5, %c0_6] : memref<96x64xf32, #tpu.memory_space<vmem>>, vector<96x64xf32>
    %c0_7 = arith.constant 0 : index
    %c0_8 = arith.constant 0 : index
    %7 = vector.load %arg5[%c0_7, %c0_8] : memref<64x256xf32, #tpu.memory_space<vmem>>, vector<64x256xf32>
    %cst_9 = arith.constant dense<0.000000e+00> : vector<96x256xf32>
    %8 = tpu.matmul %6, %7, %cst_9 {dimension_numbers = #tpu.dot_dimension_numbers<[1], [0], [0], [1], [0, 0, 1, 1], [], []>} : vector<96x64xf32>, vector<64x256xf32>, vector<96x256xf32> -> vector<96x256xf32>
    %9 = vector.extract_strided_slice %8 {offsets = [0, 0], sizes = [24, 256], strides = [1, 1]} : vector<96x256xf32> to vector<24x256xf32>
    %10 = vector.extract_strided_slice %8 {offsets = [24, 0], sizes = [24, 256], strides = [1, 1]} : vector<96x256xf32> to vector<24x256xf32>
    %11 = vector.extract_strided_slice %8 {offsets = [48, 0], sizes = [24, 256], strides = [1, 1]} : vector<96x256xf32> to vector<24x256xf32>
    %12 = vector.extract_strided_slice %8 {offsets = [72, 0], sizes = [24, 256], strides = [1, 1]} : vector<96x256xf32> to vector<24x256xf32>
    %13 = vector.extract_strided_slice %5 {offsets = [0, 0], sizes = [8, 256], strides = [1, 1]} : vector<8x768xf32> to vector<8x256xf32>
    %14 = vector.extract_strided_slice %5 {offsets = [0, 256], sizes = [8, 256], strides = [1, 1]} : vector<8x768xf32> to vector<8x256xf32>
    %15 = vector.extract_strided_slice %5 {offsets = [0, 512], sizes = [8, 256], strides = [1, 1]} : vector<8x768xf32> to vector<8x256xf32>
    %16 = tpu.concatenate %13, %13, %13 in 0 : vector<8x256xf32>, vector<8x256xf32>, vector<8x256xf32> -> vector<24x256xf32>
    %17 = tpu.concatenate %14, %14, %14 in 0 : vector<8x256xf32>, vector<8x256xf32>, vector<8x256xf32> -> vector<24x256xf32>
    %18 = tpu.concatenate %15, %15, %15 in 0 : vector<8x256xf32>, vector<8x256xf32>, vector<8x256xf32> -> vector<24x256xf32>
    %19 = arith.mulf %9, %16 : vector<24x256xf32>
    %20 = arith.mulf %10, %17 : vector<24x256xf32>
    %21 = arith.addf %19, %20 : vector<24x256xf32>
    %22 = arith.mulf %11, %18 : vector<24x256xf32>
    %23 = arith.addf %21, %22 : vector<24x256xf32>
    %24 = arith.addf %23, %12 : vector<24x256xf32>
    %c0_10 = arith.constant 0 : index
    %c0_11 = arith.constant 0 : index
    %25 = vector.load %arg6[%c0_10, %c0_11] : memref<24x256xf32, #tpu.memory_space<vmem>>, vector<24x256xf32>
    tpu.vector_store %arg6[%c0_10, %c0_11], %24 {strides = array<i32>} : memref<24x256xf32, #tpu.memory_space<vmem>>, vector<24x256xf32>,
    return
  }
  func.func @transform_0(%arg0: i32) -> (i32, i32) {
    %c0_i32 = arith.constant 0 : i32
    %c0_i32_0 = arith.constant 0 : i32
    return %arg0, %c0_i32 : i32, i32
  }
  func.func @transform_1(%arg0: i32) -> (i32, i32) {
    %c0_i32 = arith.constant 0 : i32
    %c0_i32_0 = arith.constant 0 : i32
    return %arg0, %c0_i32 : i32, i32
  }
  func.func @transform_2(%arg0: i32) -> (i32, i32) {
    %c0_i32 = arith.constant 0 : i32
    %c0_i32_0 = arith.constant 0 : i32
    %c0_i32_1 = arith.constant 0 : i32
    return %c0_i32, %c0_i32_0 : i32, i32
  }
  func.func @transform_3(%arg0: i32) -> (i32, i32) {
    %c0_i32 = arith.constant 0 : i32
    %c0_i32_0 = arith.constant 0 : i32
    %c0_i32_1 = arith.constant 0 : i32
    return %c0_i32, %c0_i32_0 : i32, i32
  }
  func.func @transform_4(%arg0: i32) -> (i32, i32) {
    %c0_i32 = arith.constant 0 : i32
    %c0_i32_0 = arith.constant 0 : i32
    %c0_i32_1 = arith.constant 0 : i32
    return %c0_i32, %c0_i32_0 : i32, i32
  }
  func.func @transform_5(%arg0: i32) -> (i32, i32) {
    %c0_i32 = arith.constant 0 : i32
    %c0_i32_0 = arith.constant 0 : i32
    return %arg0, %c0_i32 : i32, i32
  }
}

</mosaic_0001>

<llo_original>
// kernel: lbs_pallas.1
$region0: #{lbs_pallas.1}
  #allocation0 [shape = 'u32[]', space=smem, size = 0x4, offset = 0x4, fixed_abs, tag = 'smem constant byte address 0x4 - core index']
  #allocation1 [shape = 'u32[144,128]{1,0:T(1,128)}', space=vmem, size = 0x12000, scoped, tag = 'internal scratch']
  %s0 = inlined_call_operand.vmem [shape: bf16[8,512], index: 0, kind: input, shape index: {}]
  %s1 = inlined_call_operand.vmem [shape: f32[96,64], index: 1, kind: input, shape index: {}]
  %s2 = inlined_call_operand.hbm [shape: bf16[512,768], index: 2, kind: input, shape index: {}]
  %s3 = inlined_call_operand.vmem [shape: f32[1,768], index: 3, kind: input, shape index: {}]
  %s4 = inlined_call_operand.vmem [shape: f32[64,256], index: 4, kind: input, shape index: {}]
  %s5 = inlined_call_operand.hbm [shape: f32[24,256], index: 5, kind: output, shape index: {}]
  %s6 = sld [smem:[#allocation0]]
  $region34: #{lbs_pallas.1} parent=0
    _
  %s8 = ssub.s32 1, %s6
  %s9 = scalar_select 0, %s8, %s6
  $region1: #{lbs_pallas.1} parent=0
    #allocation2 [shape = 'u8[786432]{0}', space=vmem, size = 0xc0000, scoped, tag = 'input window, operand 2, single buffered']
    #allocation3 [shape = 's32[1]{0}', space=sflag, size = 0x4, scoped, tag = 'scoped memory for lbs_pallas.1']
    #allocation4 [shape = 's32[1]{0}', space=sflag, size = 0x4, scoped, tag = 'scoped memory for lbs_pallas.1']
    #allocation5 [shape = 'u8[24576]{0}', space=vmem, size = 0x6000, scoped, tag = 'output window, operand 0, single buffered']
    %10 = vsyncpa [#allocation3], 0
    %11 = vsyncpa [#allocation4], 0
    // Predicated region
    $region2: #{lbs_pallas.1} parent=1 // pred_check
      _
    $region3: #{lbs_pallas.1} parent=1 // pred_check_branch
      %13 = sbr.rel (0) target = $region5
    $region4: #{lbs_pallas.1} parent=1 // pred_region
      _
    $region5: #{lbs_pallas.1} parent=1 // pred_fallthru
      _
    // Predicated region
    $region6: #{lbs_pallas.1} parent=1 // pred_check
      _
    $region7: #{lbs_pallas.1} parent=1 // pred_check_branch
      %15 = sbr.rel (0) target = $region9
    $region8: #{lbs_pallas.1} parent=1 // pred_region
      _
    $region9: #{lbs_pallas.1} parent=1 // pred_fallthru
      _
    // Predicated region
    $region10: #{lbs_pallas.1} parent=1 // pred_check
      _
    $region11: #{lbs_pallas.1} parent=1 // pred_check_branch
      %17 = sbr.rel (0) target = $region13
    $region12: #{lbs_pallas.1} parent=1 // pred_region
      %s19 = ssub.s32 24576, 24576
      %20 = vsyncadd [#allocation3], %s19
      %s21 = sshll.u32 [#allocation2], 4
      %s22 = int_to_ptr.vmem [resolvable:$true] %s21
      %27 = dma.hbm_to_vmem [thread:$0]  %s2, 24576, %s22, [#allocation3], 384, 384, 24
    $region13: #{lbs_pallas.1} parent=1 // pred_fallthru
      _
    // Predicated region
    $region14: #{lbs_pallas.1} parent=1 // pred_check
      _
    $region15: #{lbs_pallas.1} parent=1 // pred_check_branch
      %29 = sbr.rel (0) target = $region17
    $region16: #{lbs_pallas.1} parent=1 // pred_region
      _
    $region17: #{lbs_pallas.1} parent=1 // pred_fallthru
      _
    // Predicated region
    $region18: #{lbs_pallas.1} parent=1 // pred_check
      _
    $region19: #{lbs_pallas.1} parent=1 // pred_check_branch
      %31 = sbr.rel (0) target = $region21
    $region20: #{lbs_pallas.1} parent=1 // pred_region
      _
    $region21: #{lbs_pallas.1} parent=1 // pred_fallthru
      _
    // Predicated region
    $region22: #{lbs_pallas.1} parent=1 // pred_check
      _
    $region23: #{lbs_pallas.1} parent=1 // pred_check_branch
      %33 = sbr.rel (0) target = $region25
    $region24: #{lbs_pallas.1} parent=1 // pred_region
      %34 = dma.done [#allocation3], 24576
    $region25: #{lbs_pallas.1} parent=1 // pred_fallthru
      _
    %v35 = vld [vmem:[%s0] sm:$0xff]
    %v36 = vld [vmem:[%s0 + $0x8] sm:$0xff]
    %v37 = vld [vmem:[#allocation2] sm:$0xff]
    %v38 = vld [vmem:[#allocation2 + $0x8] sm:$0xff]
    %v39 = vld [vmem:[#allocation2 + $0x10] sm:$0xff]
    %v40 = vld [vmem:[#allocation2 + $0x18] sm:$0xff]
    %v41 = vld [vmem:[#allocation2 + $0x20] sm:$0xff]
    %v42 = vld [vmem:[#allocation2 + $0x28] sm:$0xff]
    %v43 = vld [vmem:[#allocation2 + $0x30] sm:$0xff]
    %v44 = vld [vmem:[#allocation2 + $0x38] sm:$0xff]
    %v45 = vld [vmem:[#allocation2 + $0x40] sm:$0xff]
    %v46 = vld [vmem:[#allocation2 + $0x48] sm:$0xff]
    %v47 = vld [vmem:[#allocation2 + $0x50] sm:$0xff]
    %v48 = vld [vmem:[#allocation2 + $0x58] sm:$0xff]
    %v49 = vld [vmem:[#allocation2 + $0x60] sm:$0xff]
    %v50 = vld [vmem:[#allocation2 + $0x68] sm:$0xff]
    %v51 = vld [vmem:[#allocation2 + $0x70] sm:$0xff]
    %v52 = vld [vmem:[#allocation2 + $0x78] sm:$0xff]
    %v53 = vld [vmem:[#allocation2 + $0x80] sm:$0xff]
    %v54 = vld [vmem:[#allocation2 + $0x88] sm:$0xff]
    %v55 = vld [vmem:[#allocation2 + $0x90] sm:$0xff]
    %v56 = vld [vmem:[#allocation2 + $0x98] sm:$0xff]
    %v57 = vld [vmem:[#allocation2 + $0xa0] sm:$0xff]
    %v58 = vld [vmem:[#allocation2 + $0xa8] sm:$0xff]
    %v59 = vld [vmem:[#allocation2 + $0xb0] sm:$0xff]
    %v60 = vld [vmem:[#allocation2 + $0xb8] sm:$0xff]
    %v61 = vld [vmem:[#allocation2 + $0xc0] sm:$0xff]
    %v62 = vld [vmem:[#allocation2 + $0xc8] sm:$0xff]
    %v63 = vld [vmem:[#allocation2 + $0xd0] sm:$0xff]
    %v64 = vld [vmem:[#allocation2 + $0xd8] sm:$0xff]
    %v65 = vld [vmem:[#allocation2 + $0xe0] sm:$0xff]
    %v66 = vld [vmem:[#allocation2 + $0xe8] sm:$0xff]
    %v67 = vld [vmem:[#allocation2 + $0xf0] sm:$0xff]
    %v68 = vld [vmem:[#allocation2 + $0xf8] sm:$0xff]
    %v69 = vld [vmem:[#allocation2 + $0x100] sm:$0xff]
    %v70 = vld [vmem:[#allocation2 + $0x108] sm:$0xff]
    %v71 = vld [vmem:[#allocation2 + $0x110] sm:$0xff]
    %v72 = vld [vmem:[#allocation2 + $0x118] sm:$0xff]
    %v73 = vld [vmem:[#allocation2 + $0x120] sm:$0xff]
    %v74 = vld [vmem:[#allocation2 + $0x128] sm:$0xff]
    %v75 = vld [vmem:[#allocation2 + $0x130] sm:$0xff]
    %v76 = vld [vmem:[#allocation2 + $0x138] sm:$0xff]
    %v77 = vld [vmem:[#allocation2 + $0x140] sm:$0xff]
    %v78 = vld [vmem:[#allocation2 + $0x148] sm:$0xff]
    %v79 = vld [vmem:[#allocation2 + $0x150] sm:$0xff]
    %v80 = vld [vmem:[#allocation2 + $0x158] sm:$0xff]
    %v81 = vld [vmem:[#allocation2 + $0x160] sm:$0xff]
    %v82 = vld [vmem:[#allocation2 + $0x168] sm:$0xff]
    %v83 = vld [vmem:[#allocation2 + $0x170] sm:$0xff]
    %v84 = vld [vmem:[#allocation2 + $0x178] sm:$0xff]
    %v85 = vld [vmem:[#allocation2 + $0x180] sm:$0xff]
    %v86 = vld [vmem:[#allocation2 + $0x188] sm:$0xff]
    %v87 = vld [vmem:[#allocation2 + $0x190] sm:$0xff]
    %v88 = vld [vmem:[#allocation2 + $0x198] sm:$0xff]
    %v89 = vld [vmem:[#allocation2 + $0x1a0] sm:$0xff]
    %v90 = vld [vmem:[#allocation2 + $0x1a8] sm:$0xff]
    %v91 = vld [vmem:[#allocation2 + $0x1b0] sm:$0xff]
    %v92 = vld [vmem:[#allocation2 + $0x1b8] sm:$0xff]
    %v93 = vld [vmem:[#allocation2 + $0x1c0] sm:$0xff]
    %v94 = vld [vmem:[#allocation2 + $0x1c8] sm:$0xff]
    %v95 = vld [vmem:[#allocation2 + $0x1d0] sm:$0xff]
    %v96 = vld [vmem:[#allocation2 + $0x1d8] sm:$0xff]
    %v97 = vld [vmem:[#allocation2 + $0x1e0] sm:$0xff]
    %v98 = vld [vmem:[#allocation2 + $0x1e8] sm:$0xff]
    %v99 = vld [vmem:[#allocation2 + $0x1f0] sm:$0xff]
    %v100 = vld [vmem:[#allocation2 + $0x1f8] sm:$0xff]
    %v101 = vld [vmem:[#allocation2 + $0x200] sm:$0xff]
    %v102 = vld [vmem:[#allocation2 + $0x208] sm:$0xff]
    %v103 = vld [vmem:[#allocation2 + $0x210] sm:$0xff]
    %v104 = vld [vmem:[#allocation2 + $0x218] sm:$0xff]
    %v105 = vld [vmem:[#allocation2 + $0x220] sm:$0xff]
    %v106 = vld [vmem:[#allocation2 + $0x228] sm:$0xff]
    %v107 = vld [vmem:[#allocation2 + $0x230] sm:$0xff]
    %v108 = vld [vmem:[#allocation2 + $0x238] sm:$0xff]
    %v109 = vld [vmem:[#allocation2 + $0x240] sm:$0xff]
    %v110 = vld [vmem:[#allocation2 + $0x248] sm:$0xff]
    %v111 = vld [vmem:[#allocation2 + $0x250] sm:$0xff]
    %v112 = vld [vmem:[#allocation2 + $0x258] sm:$0xff]
    %v113 = vld [vmem:[#allocation2 + $0x260] sm:$0xff]
    %v114 = vld [vmem:[#allocation2 + $0x268] sm:$0xff]
    %v115 = vld [vmem:[#allocation2 + $0x270] sm:$0xff]
    %v116 = vld [vmem:[#allocation2 + $0x278] sm:$0xff]
    %v117 = vld [vmem:[#allocation2 + $0x280] sm:$0xff]
    %v118 = vld [vmem:[#allocation2 + $0x288] sm:$0xff]
    %v119 = vld [vmem:[#allocation2 + $0x290] sm:$0xff]
    %v120 = vld [vmem:[#allocation2 + $0x298] sm:$0xff]
    %v121 = vld [vmem:[#allocation2 + $0x2a0] sm:$0xff]
    %v122 = vld [vmem:[#allocation2 + $0x2a8] sm:$0xff]
    %v123 = vld [vmem:[#allocation2 + $0x2b0] sm:$0xff]
    %v124 = vld [vmem:[#allocation2 + $0x2b8] sm:$0xff]
    %v125 = vld [vmem:[#allocation2 + $0x2c0] sm:$0xff]
    %v126 = vld [vmem:[#allocation2 + $0x2c8] sm:$0xff]
    %v127 = vld [vmem:[#allocation2 + $0x2d0] sm:$0xff]
    %v128 = vld [vmem:[#allocation2 + $0x2d8] sm:$0xff]
    %v129 = vld [vmem:[#allocation2 + $0x2e0] sm:$0xff]
    %v130 = vld [vmem:[#allocation2 + $0x2e8] sm:$0xff]
    %v131 = vld [vmem:[#allocation2 + $0x2f0] sm:$0xff]
    %v132 = vld [vmem:[#allocation2 + $0x2f8] sm:$0xff]
    %v133 = vld [vmem:[#allocation2 + $0x300] sm:$0xff]
    %v134 = vld [vmem:[#allocation2 + $0x308] sm:$0xff]
    %v135 = vld [vmem:[#allocation2 + $0x310] sm:$0xff]
    %v136 = vld [vmem:[#allocation2 + $0x318] sm:$0xff]
    %v137 = vld [vmem:[#allocation2 + $0x320] sm:$0xff]
    %v138 = vld [vmem:[#allocation2 + $0x328] sm:$0xff]
    %v139 = vld [vmem:[#allocation2 + $0x330] sm:$0xff]
    %v140 = vld [vmem:[#allocation2 + $0x338] sm:$0xff]
    %v141 = vld [vmem:[#allocation2 + $0x340] sm:$0xff]
    %v142 = vld [vmem:[#allocation2 + $0x348] sm:$0xff]
    %v143 = vld [vmem:[#allocation2 + $0x350] sm:$0xff]
    %v144 = vld [vmem:[#allocation2 + $0x358] sm:$0xff]
    %v145 = vld [vmem:[#allocation2 + $0x360] sm:$0xff]
    %v146 = vld [vmem:[#allocation2 + $0x368] sm:$0xff]
    %v147 = vld [vmem:[#allocation2 + $0x370] sm:$0xff]
    %v148 = vld [vmem:[#allocation2 + $0x378] sm:$0xff]
    %v149 = vld [vmem:[#allocation2 + $0x380] sm:$0xff]
    %v150 = vld [vmem:[#allocation2 + $0x388] sm:$0xff]
    %v151 = vld [vmem:[#allocation2 + $0x390] sm:$0xff]
    %v152 = vld [vmem:[#allocation2 + $0x398] sm:$0xff]
    %v153 = vld [vmem:[#allocation2 + $0x3a0] sm:$0xff]
    %v154 = vld [vmem:[#allocation2 + $0x3a8] sm:$0xff]
    %v155 = vld [vmem:[#allocation2 + $0x3b0] sm:$0xff]
    %v156 = vld [vmem:[#allocation2 + $0x3b8] sm:$0xff]
    %v157 = vld [vmem:[#allocation2 + $0x3c0] sm:$0xff]
    %v158 = vld [vmem:[#allocation2 + $0x3c8] sm:$0xff]
    %v159 = vld [vmem:[#allocation2 + $0x3d0] sm:$0xff]
    %v160 = vld [vmem:[#allocation2 + $0x3d8] sm:$0xff]
    %v161 = vld [vmem:[#allocation2 + $0x3e0] sm:$0xff]
    %v162 = vld [vmem:[#allocation2 + $0x3e8] sm:$0xff]
    %v163 = vld [vmem:[#allocation2 + $0x3f0] sm:$0xff]
    %v164 = vld [vmem:[#allocation2 + $0x3f8] sm:$0xff]
    %v165 = vld [vmem:[#allocation2 + $0x400] sm:$0xff]
    %v166 = vld [vmem:[#allocation2 + $0x408] sm:$0xff]
    %v167 = vld [vmem:[#allocation2 + $0x410] sm:$0xff]
    %v168 = vld [vmem:[#allocation2 + $0x418] sm:$0xff]
    %v169 = vld [vmem:[#allocation2 + $0x420] sm:$0xff]
    %v170 = vld [vmem:[#allocation2 + $0x428] sm:$0xff]
    %v171 = vld [vmem:[#allocation2 + $0x430] sm:$0xff]
    %v172 = vld [vmem:[#allocation2 + $0x438] sm:$0xff]
    %v173 = vld [vmem:[#allocation2 + $0x440] sm:$0xff]
    %v174 = vld [vmem:[#allocation2 + $0x448] sm:$0xff]
    %v175 = vld [vmem:[#allocation2 + $0x450] sm:$0xff]
    %v176 = vld [vmem:[#allocation2 + $0x458] sm:$0xff]
    %v177 = vld [vmem:[#allocation2 + $0x460] sm:$0xff]
    %v178 = vld [vmem:[#allocation2 + $0x468] sm:$0xff]
    %v179 = vld [vmem:[#allocation2 + $0x470] sm:$0xff]
    %v180 = vld [vmem:[#allocation2 + $0x478] sm:$0xff]
    %v181 = vld [vmem:[#allocation2 + $0x480] sm:$0xff]
    %v182 = vld [vmem:[#allocation2 + $0x488] sm:$0xff]
    %v183 = vld [vmem:[#allocation2 + $0x490] sm:$0xff]
    %v184 = vld [vmem:[#allocation2 + $0x498] sm:$0xff]
    %v185 = vld [vmem:[#allocation2 + $0x4a0] sm:$0xff]
    %v186 = vld [vmem:[#allocation2 + $0x4a8] sm:$0xff]
    %v187 = vld [vmem:[#allocation2 + $0x4b0] sm:$0xff]
    %v188 = vld [vmem:[#allocation2 + $0x4b8] sm:$0xff]
    %v189 = vld [vmem:[#allocation2 + $0x4c0] sm:$0xff]
    %v190 = vld [vmem:[#allocation2 + $0x4c8] sm:$0xff]
    %v191 = vld [vmem:[#allocation2 + $0x4d0] sm:$0xff]
    %v192 = vld [vmem:[#allocation2 + $0x4d8] sm:$0xff]
    %v193 = vld [vmem:[#allocation2 + $0x4e0] sm:$0xff]
    %v194 = vld [vmem:[#allocation2 + $0x4e8] sm:$0xff]
    %v195 = vld [vmem:[#allocation2 + $0x4f0] sm:$0xff]
    %v196 = vld [vmem:[#allocation2 + $0x4f8] sm:$0xff]
    %v197 = vld [vmem:[#allocation2 + $0x500] sm:$0xff]
    %v198 = vld [vmem:[#allocation2 + $0x508] sm:$0xff]
    %v199 = vld [vmem:[#allocation2 + $0x510] sm:$0xff]
    %v200 = vld [vmem:[#allocation2 + $0x518] sm:$0xff]
    %v201 = vld [vmem:[#allocation2 + $0x520] sm:$0xff]
    %v202 = vld [vmem:[#allocation2 + $0x528] sm:$0xff]
    %v203 = vld [vmem:[#allocation2 + $0x530] sm:$0xff]
    %v204 = vld [vmem:[#allocation2 + $0x538] sm:$0xff]
    %v205 = vld [vmem:[#allocation2 + $0x540] sm:$0xff]
    %v206 = vld [vmem:[#allocation2 + $0x548] sm:$0xff]
    %v207 = vld [vmem:[#allocation2 + $0x550] sm:$0xff]
    %v208 = vld [vmem:[#allocation2 + $0x558] sm:$0xff]
    %v209 = vld [vmem:[#allocation2 + $0x560] sm:$0xff]
    %v210 = vld [vmem:[#allocation2 + $0x568] sm:$0xff]
    %v211 = vld [vmem:[#allocation2 + $0x570] sm:$0xff]
    %v212 = vld [vmem:[#allocation2 + $0x578] sm:$0xff]
    %v213 = vld [vmem:[#allocation2 + $0x580] sm:$0xff]
    %v214 = vld [vmem:[#allocation2 + $0x588] sm:$0xff]
    %v215 = vld [vmem:[#allocation2 + $0x590] sm:$0xff]
    %v216 = vld [vmem:[#allocation2 + $0x598] sm:$0xff]
    %v217 = vld [vmem:[#allocation2 + $0x5a0] sm:$0xff]
    %v218 = vld [vmem:[#allocation2 + $0x5a8] sm:$0xff]
    %v219 = vld [vmem:[#allocation2 + $0x5b0] sm:$0xff]
    %v220 = vld [vmem:[#allocation2 + $0x5b8] sm:$0xff]
    %v221 = vld [vmem:[#allocation2 + $0x5c0] sm:$0xff]
    %v222 = vld [vmem:[#allocation2 + $0x5c8] sm:$0xff]
    %v223 = vld [vmem:[#allocation2 + $0x5d0] sm:$0xff]
    %v224 = vld [vmem:[#allocation2 + $0x5d8] sm:$0xff]
    %v225 = vld [vmem:[#allocation2 + $0x5e0] sm:$0xff]
    %v226 = vld [vmem:[#allocation2 + $0x5e8] sm:$0xff]
    %v227 = vld [vmem:[#allocation2 + $0x5f0] sm:$0xff]
    %v228 = vld [vmem:[#allocation2 + $0x5f8] sm:$0xff]
    %v229 = vld [vmem:[%s3] sm:$0x3f]
    %v231 = vlaneseq
    %v232 = vshrl.u32 %v231, 7
    %v233 = vsub.s32 0, %v232
    %v234 = vrot.slane %v229, %v233
    %v235 = vlaneseq
    %v236 = vshrl.u32 %v235, 7
    %v237 = vsub.s32 1, %v236
    %v238 = vrot.slane %v229, %v237
    %v239 = vlaneseq
    %v240 = vshrl.u32 %v239, 7
    %v241 = vsub.s32 2, %v240
    %v242 = vrot.slane %v229, %v241
    %v243 = vlaneseq
    %v244 = vshrl.u32 %v243, 7
    %v245 = vsub.s32 3, %v244
    %v246 = vrot.slane %v229, %v245
    %v247 = vlaneseq
    %v248 = vshrl.u32 %v247, 7
    %v249 = vsub.s32 4, %v248
    %v250 = vrot.slane %v229, %v249
    %v251 = vlaneseq
    %v252 = vshrl.u32 %v251, 7
    %v253 = vsub.s32 5, %v252
    %v254 = vrot.slane %v229, %v253
    %v263 = vunpack.c.l.b16 %v35
    %v264 = vunpack.c.h.b16 %v35
    %v265 = vunpack.c.l.b16 %v36
    %v266 = vunpack.c.h.b16 %v36
    %v267 = vpack.c.b16 %v263, %v263
    %v268 = vpack.c.b16 %v264, %v264
    %v269 = vpack.c.b16 %v265, %v265
    %v270 = vpack.c.b16 %v266, %v266
    %v467 = vunpack.c.l.b16 %v37
    %v468 = vunpack.c.h.b16 %v37
    %v469 = vunpack.c.l.b16 %v38
    %v470 = vunpack.c.h.b16 %v38
    %v471 = vunpack.c.l.b16 %v39
    %v472 = vunpack.c.h.b16 %v39
    %v473 = vunpack.c.l.b16 %v40
    %v474 = vunpack.c.h.b16 %v40
    %v475 = vunpack.c.l.b16 %v41
    %v476 = vunpack.c.h.b16 %v41
    %v477 = vunpack.c.l.b16 %v42
    %v478 = vunpack.c.h.b16 %v42
    %v479 = vunpack.c.l.b16 %v43
    %v480 = vunpack.c.h.b16 %v43
    %v481 = vunpack.c.l.b16 %v44
    %v482 = vunpack.c.h.b16 %v44
    %v483 = vunpack.c.l.b16 %v45
    %v484 = vunpack.c.h.b16 %v45
    %v485 = vunpack.c.l.b16 %v46
    %v486 = vunpack.c.h.b16 %v46
    %v487 = vunpack.c.l.b16 %v47
    %v488 = vunpack.c.h.b16 %v47
    %v489 = vunpack.c.l.b16 %v48
    %v490 = vunpack.c.h.b16 %v48
    %v491 = vunpack.c.l.b16 %v49
    %v492 = vunpack.c.h.b16 %v49
    %v493 = vunpack.c.l.b16 %v50
    %v494 = vunpack.c.h.b16 %v50
    %v495 = vunpack.c.l.b16 %v51
    %v496 = vunpack.c.h.b16 %v51
    %v497 = vunpack.c.l.b16 %v52
    %v498 = vunpack.c.h.b16 %v52
    %v499 = vunpack.c.l.b16 %v53
    %v500 = vunpack.c.h.b16 %v53
    %v501 = vunpack.c.l.b16 %v54
    %v502 = vunpack.c.h.b16 %v54
    %v503 = vunpack.c.l.b16 %v55
    %v504 = vunpack.c.h.b16 %v55
    %v505 = vunpack.c.l.b16 %v56
    %v506 = vunpack.c.h.b16 %v56
    %v507 = vunpack.c.l.b16 %v57
    %v508 = vunpack.c.h.b16 %v57
    %v509 = vunpack.c.l.b16 %v58
    %v510 = vunpack.c.h.b16 %v58
    %v511 = vunpack.c.l.b16 %v59
    %v512 = vunpack.c.h.b16 %v59
    %v513 = vunpack.c.l.b16 %v60
    %v514 = vunpack.c.h.b16 %v60
    %v515 = vunpack.c.l.b16 %v61
    %v516 = vunpack.c.h.b16 %v61
    %v517 = vunpack.c.l.b16 %v62
    %v518 = vunpack.c.h.b16 %v62
    %v519 = vunpack.c.l.b16 %v63
    %v520 = vunpack.c.h.b16 %v63
    %v521 = vunpack.c.l.b16 %v64
    %v522 = vunpack.c.h.b16 %v64
    %v523 = vunpack.c.l.b16 %v65
    %v524 = vunpack.c.h.b16 %v65
    %v525 = vunpack.c.l.b16 %v66
    %v526 = vunpack.c.h.b16 %v66
    %v527 = vunpack.c.l.b16 %v67
    %v528 = vunpack.c.h.b16 %v67
    %v529 = vunpack.c.l.b16 %v68
    %v530 = vunpack.c.h.b16 %v68
    %v531 = vunpack.c.l.b16 %v69
    %v532 = vunpack.c.h.b16 %v69
    %v533 = vunpack.c.l.b16 %v70
    %v534 = vunpack.c.h.b16 %v70
    %v535 = vunpack.c.l.b16 %v71
    %v536 = vunpack.c.h.b16 %v71
    %v537 = vunpack.c.l.b16 %v72
    %v538 = vunpack.c.h.b16 %v72
    %v539 = vunpack.c.l.b16 %v73
    %v540 = vunpack.c.h.b16 %v73
    %v541 = vunpack.c.l.b16 %v74
    %v542 = vunpack.c.h.b16 %v74
    %v543 = vunpack.c.l.b16 %v75
    %v544 = vunpack.c.h.b16 %v75
    %v545 = vunpack.c.l.b16 %v76
    %v546 = vunpack.c.h.b16 %v76
    %v547 = vunpack.c.l.b16 %v77
    %v548 = vunpack.c.h.b16 %v77
    %v549 = vunpack.c.l.b16 %v78
    %v550 = vunpack.c.h.b16 %v78
    %v551 = vunpack.c.l.b16 %v79
    %v552 = vunpack.c.h.b16 %v79
    %v553 = vunpack.c.l.b16 %v80
    %v554 = vunpack.c.h.b16 %v80
    %v555 = vunpack.c.l.b16 %v81
    %v556 = vunpack.c.h.b16 %v81
    %v557 = vunpack.c.l.b16 %v82
    %v558 = vunpack.c.h.b16 %v82
    %v559 = vunpack.c.l.b16 %v83
    %v560 = vunpack.c.h.b16 %v83
    %v561 = vunpack.c.l.b16 %v84
    %v562 = vunpack.c.h.b16 %v84
    %v563 = vunpack.c.l.b16 %v85
    %v564 = vunpack.c.h.b16 %v85
    %v565 = vunpack.c.l.b16 %v86
    %v566 = vunpack.c.h.b16 %v86
    %v567 = vunpack.c.l.b16 %v87
    %v568 = vunpack.c.h.b16 %v87
    %v569 = vunpack.c.l.b16 %v88
    %v570 = vunpack.c.h.b16 %v88
    %v571 = vunpack.c.l.b16 %v89
    %v572 = vunpack.c.h.b16 %v89
    %v573 = vunpack.c.l.b16 %v90
    %v574 = vunpack.c.h.b16 %v90
    %v575 = vunpack.c.l.b16 %v91
    %v576 = vunpack.c.h.b16 %v91
    %v577 = vunpack.c.l.b16 %v92
    %v578 = vunpack.c.h.b16 %v92
    %v579 = vunpack.c.l.b16 %v93
    %v580 = vunpack.c.h.b16 %v93
    %v581 = vunpack.c.l.b16 %v94
    %v582 = vunpack.c.h.b16 %v94
    %v583 = vunpack.c.l.b16 %v95
    %v584 = vunpack.c.h.b16 %v95
    %v585 = vunpack.c.l.b16 %v96
    %v586 = vunpack.c.h.b16 %v96
    %v587 = vunpack.c.l.b16 %v97
    %v588 = vunpack.c.h.b16 %v97
    %v589 = vunpack.c.l.b16 %v98
    %v590 = vunpack.c.h.b16 %v98
    %v591 = vunpack.c.l.b16 %v99
    %v592 = vunpack.c.h.b16 %v99
    %v593 = vunpack.c.l.b16 %v100
    %v594 = vunpack.c.h.b16 %v100
    %v595 = vunpack.c.l.b16 %v101
    %v596 = vunpack.c.h.b16 %v101
    %v597 = vunpack.c.l.b16 %v102
    %v598 = vunpack.c.h.b16 %v102
    %v599 = vunpack.c.l.b16 %v103
    %v600 = vunpack.c.h.b16 %v103
    %v601 = vunpack.c.l.b16 %v104
    %v602 = vunpack.c.h.b16 %v104
    %v603 = vunpack.c.l.b16 %v105
    %v604 = vunpack.c.h.b16 %v105
    %v605 = vunpack.c.l.b16 %v106
    %v606 = vunpack.c.h.b16 %v106
    %v607 = vunpack.c.l.b16 %v107
    %v608 = vunpack.c.h.b16 %v107
    %v609 = vunpack.c.l.b16 %v108
    %v610 = vunpack.c.h.b16 %v108
    %v611 = vunpack.c.l.b16 %v109
    %v612 = vunpack.c.h.b16 %v109
    %v613 = vunpack.c.l.b16 %v110
    %v614 = vunpack.c.h.b16 %v110
    %v615 = vunpack.c.l.b16 %v111
    %v616 = vunpack.c.h.b16 %v111
    %v617 = vunpack.c.l.b16 %v112
    %v618 = vunpack.c.h.b16 %v112
    %v619 = vunpack.c.l.b16 %v113
    %v620 = vunpack.c.h.b16 %v113
    %v621 = vunpack.c.l.b16 %v114
    %v622 = vunpack.c.h.b16 %v114
    %v623 = vunpack.c.l.b16 %v115
    %v624 = vunpack.c.h.b16 %v115
    %v625 = vunpack.c.l.b16 %v116
    %v626 = vunpack.c.h.b16 %v116
    %v627 = vunpack.c.l.b16 %v117
    %v628 = vunpack.c.h.b16 %v117
    %v629 = vunpack.c.l.b16 %v118
    %v630 = vunpack.c.h.b16 %v118
    %v631 = vunpack.c.l.b16 %v119
    %v632 = vunpack.c.h.b16 %v119
    %v633 = vunpack.c.l.b16 %v120
    %v634 = vunpack.c.h.b16 %v120
    %v635 = vunpack.c.l.b16 %v121
    %v636 = vunpack.c.h.b16 %v121
    %v637 = vunpack.c.l.b16 %v122
    %v638 = vunpack.c.h.b16 %v122
    %v639 = vunpack.c.l.b16 %v123
    %v640 = vunpack.c.h.b16 %v123
    %v641 = vunpack.c.l.b16 %v124
    %v642 = vunpack.c.h.b16 %v124
    %v643 = vunpack.c.l.b16 %v125
    %v644 = vunpack.c.h.b16 %v125
    %v645 = vunpack.c.l.b16 %v126
    %v646 = vunpack.c.h.b16 %v126
    %v647 = vunpack.c.l.b16 %v127
    %v648 = vunpack.c.h.b16 %v127
    %v649 = vunpack.c.l.b16 %v128
    %v650 = vunpack.c.h.b16 %v128
    %v651 = vunpack.c.l.b16 %v129
    %v652 = vunpack.c.h.b16 %v129
    %v653 = vunpack.c.l.b16 %v130
    %v654 = vunpack.c.h.b16 %v130
    %v655 = vunpack.c.l.b16 %v131
    %v656 = vunpack.c.h.b16 %v131
    %v657 = vunpack.c.l.b16 %v132
    %v658 = vunpack.c.h.b16 %v132
    %v659 = vunpack.c.l.b16 %v133
    %v660 = vunpack.c.h.b16 %v133
    %v661 = vunpack.c.l.b16 %v134
    %v662 = vunpack.c.h.b16 %v134
    %v663 = vunpack.c.l.b16 %v135
    %v664 = vunpack.c.h.b16 %v135
    %v665 = vunpack.c.l.b16 %v136
    %v666 = vunpack.c.h.b16 %v136
    %v667 = vunpack.c.l.b16 %v137
    %v668 = vunpack.c.h.b16 %v137
    %v669 = vunpack.c.l.b16 %v138
    %v670 = vunpack.c.h.b16 %v138
    %v671 = vunpack.c.l.b16 %v139
    %v672 = vunpack.c.h.b16 %v139
    %v673 = vunpack.c.l.b16 %v140
    %v674 = vunpack.c.h.b16 %v140
    %v675 = vunpack.c.l.b16 %v141
    %v676 = vunpack.c.h.b16 %v141
    %v677 = vunpack.c.l.b16 %v142
    %v678 = vunpack.c.h.b16 %v142
    %v679 = vunpack.c.l.b16 %v143
    %v680 = vunpack.c.h.b16 %v143
    %v681 = vunpack.c.l.b16 %v144
    %v682 = vunpack.c.h.b16 %v144
    %v683 = vunpack.c.l.b16 %v145
    %v684 = vunpack.c.h.b16 %v145
    %v685 = vunpack.c.l.b16 %v146
    %v686 = vunpack.c.h.b16 %v146
    %v687 = vunpack.c.l.b16 %v147
    %v688 = vunpack.c.h.b16 %v147
    %v689 = vunpack.c.l.b16 %v148
    %v690 = vunpack.c.h.b16 %v148
    %v691 = vunpack.c.l.b16 %v149
    %v692 = vunpack.c.h.b16 %v149
    %v693 = vunpack.c.l.b16 %v150
    %v694 = vunpack.c.h.b16 %v150
    %v695 = vunpack.c.l.b16 %v151
    %v696 = vunpack.c.h.b16 %v151
    %v697 = vunpack.c.l.b16 %v152
    %v698 = vunpack.c.h.b16 %v152
    %v699 = vunpack.c.l.b16 %v153
    %v700 = vunpack.c.h.b16 %v153
    %v701 = vunpack.c.l.b16 %v154
    %v702 = vunpack.c.h.b16 %v154
    %v703 = vunpack.c.l.b16 %v155
    %v704 = vunpack.c.h.b16 %v155
    %v705 = vunpack.c.l.b16 %v156
    %v706 = vunpack.c.h.b16 %v156
    %v707 = vunpack.c.l.b16 %v157
    %v708 = vunpack.c.h.b16 %v157
    %v709 = vunpack.c.l.b16 %v158
    %v710 = vunpack.c.h.b16 %v158
    %v711 = vunpack.c.l.b16 %v159
    %v712 = vunpack.c.h.b16 %v159
    %v713 = vunpack.c.l.b16 %v160
    %v714 = vunpack.c.h.b16 %v160
    %v715 = vunpack.c.l.b16 %v161
    %v716 = vunpack.c.h.b16 %v161
    %v717 = vunpack.c.l.b16 %v162
    %v718 = vunpack.c.h.b16 %v162
    %v719 = vunpack.c.l.b16 %v163
    %v720 = vunpack.c.h.b16 %v163
    %v721 = vunpack.c.l.b16 %v164
    %v722 = vunpack.c.h.b16 %v164
    %v723 = vunpack.c.l.b16 %v165
    %v724 = vunpack.c.h.b16 %v165
    %v725 = vunpack.c.l.b16 %v166
    %v726 = vunpack.c.h.b16 %v166
    %v727 = vunpack.c.l.b16 %v167
    %v728 = vunpack.c.h.b16 %v167
    %v729 = vunpack.c.l.b16 %v168
    %v730 = vunpack.c.h.b16 %v168
    %v731 = vunpack.c.l.b16 %v169
    %v732 = vunpack.c.h.b16 %v169
    %v733 = vunpack.c.l.b16 %v170
    %v734 = vunpack.c.h.b16 %v170
    %v735 = vunpack.c.l.b16 %v171
    %v736 = vunpack.c.h.b16 %v171
    %v737 = vunpack.c.l.b16 %v172
    %v738 = vunpack.c.h.b16 %v172
    %v739 = vunpack.c.l.b16 %v173
    %v740 = vunpack.c.h.b16 %v173
    %v741 = vunpack.c.l.b16 %v174
    %v742 = vunpack.c.h.b16 %v174
    %v743 = vunpack.c.l.b16 %v175
    %v744 = vunpack.c.h.b16 %v175
    %v745 = vunpack.c.l.b16 %v176
    %v746 = vunpack.c.h.b16 %v176
    %v747 = vunpack.c.l.b16 %v177
    %v748 = vunpack.c.h.b16 %v177
    %v749 = vunpack.c.l.b16 %v178
    %v750 = vunpack.c.h.b16 %v178
    %v751 = vunpack.c.l.b16 %v179
    %v752 = vunpack.c.h.b16 %v179
    %v753 = vunpack.c.l.b16 %v180
    %v754 = vunpack.c.h.b16 %v180
    %v755 = vunpack.c.l.b16 %v181
    %v756 = vunpack.c.h.b16 %v181
    %v757 = vunpack.c.l.b16 %v182
    %v758 = vunpack.c.h.b16 %v182
    %v759 = vunpack.c.l.b16 %v183
    %v760 = vunpack.c.h.b16 %v183
    %v761 = vunpack.c.l.b16 %v184
    %v762 = vunpack.c.h.b16 %v184
    %v763 = vunpack.c.l.b16 %v185
    %v764 = vunpack.c.h.b16 %v185
    %v765 = vunpack.c.l.b16 %v186
    %v766 = vunpack.c.h.b16 %v186
    %v767 = vunpack.c.l.b16 %v187
    %v768 = vunpack.c.h.b16 %v187
    %v769 = vunpack.c.l.b16 %v188
    %v770 = vunpack.c.h.b16 %v188
    %v771 = vunpack.c.l.b16 %v189
    %v772 = vunpack.c.h.b16 %v189
    %v773 = vunpack.c.l.b16 %v190
    %v774 = vunpack.c.h.b16 %v190
    %v775 = vunpack.c.l.b16 %v191
    %v776 = vunpack.c.h.b16 %v191
    %v777 = vunpack.c.l.b16 %v192
    %v778 = vunpack.c.h.b16 %v192
    %v779 = vunpack.c.l.b16 %v193
    %v780 = vunpack.c.h.b16 %v193
    %v781 = vunpack.c.l.b16 %v194
    %v782 = vunpack.c.h.b16 %v194
    %v783 = vunpack.c.l.b16 %v195
    %v784 = vunpack.c.h.b16 %v195
    %v785 = vunpack.c.l.b16 %v196
    %v786 = vunpack.c.h.b16 %v196
    %v787 = vunpack.c.l.b16 %v197
    %v788 = vunpack.c.h.b16 %v197
    %v789 = vunpack.c.l.b16 %v198
    %v790 = vunpack.c.h.b16 %v198
    %v791 = vunpack.c.l.b16 %v199
    %v792 = vunpack.c.h.b16 %v199
    %v793 = vunpack.c.l.b16 %v200
    %v794 = vunpack.c.h.b16 %v200
    %v795 = vunpack.c.l.b16 %v201
    %v796 = vunpack.c.h.b16 %v201
    %v797 = vunpack.c.l.b16 %v202
    %v798 = vunpack.c.h.b16 %v202
    %v799 = vunpack.c.l.b16 %v203
    %v800 = vunpack.c.h.b16 %v203
    %v801 = vunpack.c.l.b16 %v204
    %v802 = vunpack.c.h.b16 %v204
    %v803 = vunpack.c.l.b16 %v205
    %v804 = vunpack.c.h.b16 %v205
    %v805 = vunpack.c.l.b16 %v206
    %v806 = vunpack.c.h.b16 %v206
    %v807 = vunpack.c.l.b16 %v207
    %v808 = vunpack.c.h.b16 %v207
    %v809 = vunpack.c.l.b16 %v208
    %v810 = vunpack.c.h.b16 %v208
    %v811 = vunpack.c.l.b16 %v209
    %v812 = vunpack.c.h.b16 %v209
    %v813 = vunpack.c.l.b16 %v210
    %v814 = vunpack.c.h.b16 %v210
    %v815 = vunpack.c.l.b16 %v211
    %v816 = vunpack.c.h.b16 %v211
    %v817 = vunpack.c.l.b16 %v212
    %v818 = vunpack.c.h.b16 %v212
    %v819 = vunpack.c.l.b16 %v213
    %v820 = vunpack.c.h.b16 %v213
    %v821 = vunpack.c.l.b16 %v214
    %v822 = vunpack.c.h.b16 %v214
    %v823 = vunpack.c.l.b16 %v215
    %v824 = vunpack.c.h.b16 %v215
    %v825 = vunpack.c.l.b16 %v216
    %v826 = vunpack.c.h.b16 %v216
    %v827 = vunpack.c.l.b16 %v217
    %v828 = vunpack.c.h.b16 %v217
    %v829 = vunpack.c.l.b16 %v218
    %v830 = vunpack.c.h.b16 %v218
    %v831 = vunpack.c.l.b16 %v219
    %v832 = vunpack.c.h.b16 %v219
    %v833 = vunpack.c.l.b16 %v220
    %v834 = vunpack.c.h.b16 %v220
    %v835 = vunpack.c.l.b16 %v221
    %v836 = vunpack.c.h.b16 %v221
    %v837 = vunpack.c.l.b16 %v222
    %v838 = vunpack.c.h.b16 %v222
    %v839 = vunpack.c.l.b16 %v223
    %v840 = vunpack.c.h.b16 %v223
    %v841 = vunpack.c.l.b16 %v224
    %v842 = vunpack.c.h.b16 %v224
    %v843 = vunpack.c.l.b16 %v225
    %v844 = vunpack.c.h.b16 %v225
    %v845 = vunpack.c.l.b16 %v226
    %v846 = vunpack.c.h.b16 %v226
    %v847 = vunpack.c.l.b16 %v227
    %v848 = vunpack.c.h.b16 %v227
    %v849 = vunpack.c.l.b16 %v228
    %v850 = vunpack.c.h.b16 %v228
    %v851 = vpack.c.b16 %v473, %v467
    %v852 = vpack.c.b16 %v474, %v468
    %v853 = vpack.c.b16 %v475, %v469
    %v854 = vpack.c.b16 %v476, %v470
    %v855 = vpack.c.b16 %v477, %v471
    %v856 = vpack.c.b16 %v478, %v472
    %v857 = vpack.c.b16 %v485, %v479
    %v858 = vpack.c.b16 %v486, %v480
    %v859 = vpack.c.b16 %v487, %v481
    %v860 = vpack.c.b16 %v488, %v482
    %v861 = vpack.c.b16 %v489, %v483
    %v862 = vpack.c.b16 %v490, %v484
    %v863 = vpack.c.b16 %v497, %v491
    %v864 = vpack.c.b16 %v498, %v492
    %v865 = vpack.c.b16 %v499, %v493
    %v866 = vpack.c.b16 %v500, %v494
    %v867 = vpack.c.b16 %v501, %v495
    %v868 = vpack.c.b16 %v502, %v496
    %v869 = vpack.c.b16 %v509, %v503
    %v870 = vpack.c.b16 %v510, %v504
    %v871 = vpack.c.b16 %v511, %v505
    %v872 = vpack.c.b16 %v512, %v506
    %v873 = vpack.c.b16 %v513, %v507
    %v874 = vpack.c.b16 %v514, %v508
    %v875 = vpack.c.b16 %v521, %v515
    %v876 = vpack.c.b16 %v522, %v516
    %v877 = vpack.c.b16 %v523, %v517
    %v878 = vpack.c.b16 %v524, %v518
    %v879 = vpack.c.b16 %v525, %v519
    %v880 = vpack.c.b16 %v526, %v520
    %v881 = vpack.c.b16 %v533, %v527
    %v882 = vpack.c.b16 %v534, %v528
    %v883 = vpack.c.b16 %v535, %v529
    %v884 = vpack.c.b16 %v536, %v530
    %v885 = vpack.c.b16 %v537, %v531
    %v886 = vpack.c.b16 %v538, %v532
    %v887 = vpack.c.b16 %v545, %v539
    %v888 = vpack.c.b16 %v546, %v540
    %v889 = vpack.c.b16 %v547, %v541
    %v890 = vpack.c.b16 %v548, %v542
    %v891 = vpack.c.b16 %v549, %v543
    %v892 = vpack.c.b16 %v550, %v544
    %v893 = vpack.c.b16 %v557, %v551
    %v894 = vpack.c.b16 %v558, %v552
    %v895 = vpack.c.b16 %v559, %v553
    %v896 = vpack.c.b16 %v560, %v554
    %v897 = vpack.c.b16 %v561, %v555
    %v898 = vpack.c.b16 %v562, %v556
    %v899 = vpack.c.b16 %v569, %v563
    %v900 = vpack.c.b16 %v570, %v564
    %v901 = vpack.c.b16 %v571, %v565
    %v902 = vpack.c.b16 %v572, %v566
    %v903 = vpack.c.b16 %v573, %v567
    %v904 = vpack.c.b16 %v574, %v568
    %v905 = vpack.c.b16 %v581, %v575
    %v906 = vpack.c.b16 %v582, %v576
    %v907 = vpack.c.b16 %v583, %v577
    %v908 = vpack.c.b16 %v584, %v578
    %v909 = vpack.c.b16 %v585, %v579
    %v910 = vpack.c.b16 %v586, %v580
    %v911 = vpack.c.b16 %v593, %v587
    %v912 = vpack.c.b16 %v594, %v588
    %v913 = vpack.c.b16 %v595, %v589
    %v914 = vpack.c.b16 %v596, %v590
    %v915 = vpack.c.b16 %v597, %v591
    %v916 = vpack.c.b16 %v598, %v592
    %v917 = vpack.c.b16 %v605, %v599
    %v918 = vpack.c.b16 %v606, %v600
    %v919 = vpack.c.b16 %v607, %v601
    %v920 = vpack.c.b16 %v608, %v602
    %v921 = vpack.c.b16 %v609, %v603
    %v922 = vpack.c.b16 %v610, %v604
    %v923 = vpack.c.b16 %v617, %v611
    %v924 = vpack.c.b16 %v618, %v612
    %v925 = vpack.c.b16 %v619, %v613
    %v926 = vpack.c.b16 %v620, %v614
    %v927 = vpack.c.b16 %v621, %v615
    %v928 = vpack.c.b16 %v622, %v616
    %v929 = vpack.c.b16 %v629, %v623
    %v930 = vpack.c.b16 %v630, %v624
    %v931 = vpack.c.b16 %v631, %v625
    %v932 = vpack.c.b16 %v632, %v626
    %v933 = vpack.c.b16 %v633, %v627
    %v934 = vpack.c.b16 %v634, %v628
    %v935 = vpack.c.b16 %v641, %v635
    %v936 = vpack.c.b16 %v642, %v636
    %v937 = vpack.c.b16 %v643, %v637
    %v938 = vpack.c.b16 %v644, %v638
    %v939 = vpack.c.b16 %v645, %v639
    %v940 = vpack.c.b16 %v646, %v640
    %v941 = vpack.c.b16 %v653, %v647
    %v942 = vpack.c.b16 %v654, %v648
    %v943 = vpack.c.b16 %v655, %v649
    %v944 = vpack.c.b16 %v656, %v650
    %v945 = vpack.c.b16 %v657, %v651
    %v946 = vpack.c.b16 %v658, %v652
    %v947 = vpack.c.b16 %v665, %v659
    %v948 = vpack.c.b16 %v666, %v660
    %v949 = vpack.c.b16 %v667, %v661
    %v950 = vpack.c.b16 %v668, %v662
    %v951 = vpack.c.b16 %v669, %v663
    %v952 = vpack.c.b16 %v670, %v664
    %v953 = vpack.c.b16 %v677, %v671
    %v954 = vpack.c.b16 %v678, %v672
    %v955 = vpack.c.b16 %v679, %v673
    %v956 = vpack.c.b16 %v680, %v674
    %v957 = vpack.c.b16 %v681, %v675
    %v958 = vpack.c.b16 %v682, %v676
    %v959 = vpack.c.b16 %v689, %v683
    %v960 = vpack.c.b16 %v690, %v684
    %v961 = vpack.c.b16 %v691, %v685
    %v962 = vpack.c.b16 %v692, %v686
    %v963 = vpack.c.b16 %v693, %v687
    %v964 = vpack.c.b16 %v694, %v688
    %v965 = vpack.c.b16 %v701, %v695
    %v966 = vpack.c.b16 %v702, %v696
    %v967 = vpack.c.b16 %v703, %v697
    %v968 = vpack.c.b16 %v704, %v698
    %v969 = vpack.c.b16 %v705, %v699
    %v970 = vpack.c.b16 %v706, %v700
    %v971 = vpack.c.b16 %v713, %v707
    %v972 = vpack.c.b16 %v714, %v708
    %v973 = vpack.c.b16 %v715, %v709
    %v974 = vpack.c.b16 %v716, %v710
    %v975 = vpack.c.b16 %v717, %v711
    %v976 = vpack.c.b16 %v718, %v712
    %v977 = vpack.c.b16 %v725, %v719
    %v978 = vpack.c.b16 %v726, %v720
    %v979 = vpack.c.b16 %v727, %v721
    %v980 = vpack.c.b16 %v728, %v722
    %v981 = vpack.c.b16 %v729, %v723
    %v982 = vpack.c.b16 %v730, %v724
    %v983 = vpack.c.b16 %v737, %v731
    %v984 = vpack.c.b16 %v738, %v732
    %v985 = vpack.c.b16 %v739, %v733
    %v986 = vpack.c.b16 %v740, %v734
    %v987 = vpack.c.b16 %v741, %v735
    %v988 = vpack.c.b16 %v742, %v736
    %v989 = vpack.c.b16 %v749, %v743
    %v990 = vpack.c.b16 %v750, %v744
    %v991 = vpack.c.b16 %v751, %v745
    %v992 = vpack.c.b16 %v752, %v746
    %v993 = vpack.c.b16 %v753, %v747
    %v994 = vpack.c.b16 %v754, %v748
    %v995 = vpack.c.b16 %v761, %v755
    %v996 = vpack.c.b16 %v762, %v756
    %v997 = vpack.c.b16 %v763, %v757
    %v998 = vpack.c.b16 %v764, %v758
    %v999 = vpack.c.b16 %v765, %v759
    %v1000 = vpack.c.b16 %v766, %v760
    %v1001 = vpack.c.b16 %v773, %v767
    %v1002 = vpack.c.b16 %v774, %v768
    %v1003 = vpack.c.b16 %v775, %v769
    %v1004 = vpack.c.b16 %v776, %v770
    %v1005 = vpack.c.b16 %v777, %v771
    %v1006 = vpack.c.b16 %v778, %v772
    %v1007 = vpack.c.b16 %v785, %v779
    %v1008 = vpack.c.b16 %v786, %v780
    %v1009 = vpack.c.b16 %v787, %v781
    %v1010 = vpack.c.b16 %v788, %v782
    %v1011 = vpack.c.b16 %v789, %v783
    %v1012 = vpack.c.b16 %v790, %v784
    %v1013 = vpack.c.b16 %v797, %v791
    %v1014 = vpack.c.b16 %v798, %v792
    %v1015 = vpack.c.b16 %v799, %v793
    %v1016 = vpack.c.b16 %v800, %v794
    %v1017 = vpack.c.b16 %v801, %v795
    %v1018 = vpack.c.b16 %v802, %v796
    %v1019 = vpack.c.b16 %v809, %v803
    %v1020 = vpack.c.b16 %v810, %v804
    %v1021 = vpack.c.b16 %v811, %v805
    %v1022 = vpack.c.b16 %v812, %v806
    %v1023 = vpack.c.b16 %v813, %v807
    %v1024 = vpack.c.b16 %v814, %v808
    %v1025 = vpack.c.b16 %v821, %v815
    %v1026 = vpack.c.b16 %v822, %v816
    %v1027 = vpack.c.b16 %v823, %v817
    %v1028 = vpack.c.b16 %v824, %v818
    %v1029 = vpack.c.b16 %v825, %v819
    %v1030 = vpack.c.b16 %v826, %v820
    %v1031 = vpack.c.b16 %v833, %v827
    %v1032 = vpack.c.b16 %v834, %v828
    %v1033 = vpack.c.b16 %v835, %v829
    %v1034 = vpack.c.b16 %v836, %v830
    %v1035 = vpack.c.b16 %v837, %v831
    %v1036 = vpack.c.b16 %v838, %v832
    %v1037 = vpack.c.b16 %v845, %v839
    %v1038 = vpack.c.b16 %v846, %v840
    %v1039 = vpack.c.b16 %v847, %v841
    %v1040 = vpack.c.b16 %v848, %v842
    %v1041 = vpack.c.b16 %v849, %v843
    %v1042 = vpack.c.b16 %v850, %v844
    %1235 = vmatprep.subr.bf16.mxu0 %v852
    %1236 = vmatpush1.bf16.msra.mxu0 %v851
    %1237 = vmatprep.subr.bf16.mxu0 %v858
    %1238 = vmatpush1.bf16.msra.mxu0 %v857
    %1239 = vmatprep.subr.bf16.mxu0 %v864
    %1240 = vmatpush1.bf16.msra.mxu0 %v863
    %1241 = vmatprep.subr.bf16.mxu0 %v870
    %1242 = vmatpush1.bf16.msra.mxu0 %v869
    %1243 = vmatprep.subr.bf16.mxu0 %v876
    %1244 = vmatpush1.bf16.msra.mxu0 %v875
    %1245 = vmatprep.subr.bf16.mxu0 %v882
    %1246 = vmatpush1.bf16.msra.mxu0 %v881
    %1247 = vmatprep.subr.bf16.mxu0 %v888
    %1248 = vmatpush1.bf16.msra.mxu0 %v887
    %1249 = vmatprep.subr.bf16.mxu0 %v894
    %1250 = vmatpush1.bf16.msra.mxu0 %v893
    %1251 = vmatprep.subr.bf16.mxu0 %v900
    %1252 = vmatpush1.bf16.msra.mxu0 %v899
    %1253 = vmatprep.subr.bf16.mxu0 %v906
    %1254 = vmatpush1.bf16.msra.mxu0 %v905
    %1255 = vmatprep.subr.bf16.mxu0 %v912
    %1256 = vmatpush1.bf16.msra.mxu0 %v911
    %1257 = vmatprep.subr.bf16.mxu0 %v918
    %1258 = vmatpush1.bf16.msra.mxu0 %v917
    %1259 = vmatprep.subr.bf16.mxu0 %v924
    %1260 = vmatpush1.bf16.msra.mxu0 %v923
    %1261 = vmatprep.subr.bf16.mxu0 %v930
    %1262 = vmatpush1.bf16.msra.mxu0 %v929
    %1263 = vmatprep.subr.bf16.mxu0 %v936
    %1264 = vmatpush1.bf16.msra.mxu0 %v935
    %1265 = vmatprep.subr.bf16.mxu0 %v942
    %1266 = vmatpush1.bf16.msra.mxu0 %v941
    %1267 = vmatprep.mubr.bf16.mxu0 %v268
    %1268 = vmatmul.mubr.bf16.gmra.mrb[0].mxu0 %v267
    %v1269 = vpop.f32.mrb[0].mxu0
    %v1270 = vadd.f32 %v234, %v1269
    %v1271 = vpop.f32.mrb[0].mxu0
    %v1272 = vadd.f32 %v238, %v1271
    %v1273 = vpop.f32.mrb[0].mxu0
    %v1274 = vpop.f32.mrb[0].mxu0
    %1275 = vdwg.mxu0
    %1276 = vmatprep.subr.bf16.mxu0 %v948
    %1277 = vmatpush1.bf16.msra.mxu0 %v947
    %1278 = vmatprep.subr.bf16.mxu0 %v954
    %1279 = vmatpush1.bf16.msra.mxu0 %v953
    %1280 = vmatprep.subr.bf16.mxu0 %v960
    %1281 = vmatpush1.bf16.msra.mxu0 %v959
    %1282 = vmatprep.subr.bf16.mxu0 %v966
    %1283 = vmatpush1.bf16.msra.mxu0 %v965
    %1284 = vmatprep.subr.bf16.mxu0 %v972
    %1285 = vmatpush1.bf16.msra.mxu0 %v971
    %1286 = vmatprep.subr.bf16.mxu0 %v978
    %1287 = vmatpush1.bf16.msra.mxu0 %v977
    %1288 = vmatprep.subr.bf16.mxu0 %v984
    %1289 = vmatpush1.bf16.msra.mxu0 %v983
    %1290 = vmatprep.subr.bf16.mxu0 %v990
    %1291 = vmatpush1.bf16.msra.mxu0 %v989
    %1292 = vmatprep.subr.bf16.mxu0 %v996
    %1293 = vmatpush1.bf16.msra.mxu0 %v995
    %1294 = vmatprep.subr.bf16.mxu0 %v1002
    %1295 = vmatpush1.bf16.msra.mxu0 %v1001
    %1296 = vmatprep.subr.bf16.mxu0 %v1008
    %1297 = vmatpush1.bf16.msra.mxu0 %v1007
    %1298 = vmatprep.subr.bf16.mxu0 %v1014
    %1299 = vmatpush1.bf16.msra.mxu0 %v1013
    %1300 = vmatprep.subr.bf16.mxu0 %v1020
    %1301 = vmatpush1.bf16.msra.mxu0 %v1019
    %1302 = vmatprep.subr.bf16.mxu0 %v1026
    %1303 = vmatpush1.bf16.msra.mxu0 %v1025
    %1304 = vmatprep.subr.bf16.mxu0 %v1032
    %1305 = vmatpush1.bf16.msra.mxu0 %v1031
    %1306 = vmatprep.subr.bf16.mxu0 %v1038
    %1307 = vmatpush1.bf16.msra.mxu0 %v1037
    %1308 = vmatprep.mubr.bf16.mxu0 %v270
    %1309 = vmatmul.mubr.bf16.gmra.mrb[0].mxu0 %v269
    %v1310 = vpop.f32.mrb[0].mxu0
    %v1311 = vadd.f32 %v1270, %v1310
    %v1312 = vpop.f32.mrb[0].mxu0
    %v1313 = vadd.f32 %v1272, %v1312
    %v1314 = vpop.f32.mrb[0].mxu0
    %v1315 = vpop.f32.mrb[0].mxu0
    %1316 = vdwg.mxu0
    %1317 = vmatprep.subr.bf16.mxu0 %v854
    %1318 = vmatpush1.bf16.msra.mxu0 %v853
    %1319 = vmatprep.subr.bf16.mxu0 %v860
    %1320 = vmatpush1.bf16.msra.mxu0 %v859
    %1321 = vmatprep.subr.bf16.mxu0 %v866
    %1322 = vmatpush1.bf16.msra.mxu0 %v865
    %1323 = vmatprep.subr.bf16.mxu0 %v872
    %1324 = vmatpush1.bf16.msra.mxu0 %v871
    %1325 = vmatprep.subr.bf16.mxu0 %v878
    %1326 = vmatpush1.bf16.msra.mxu0 %v877
    %1327 = vmatprep.subr.bf16.mxu0 %v884
    %1328 = vmatpush1.bf16.msra.mxu0 %v883
    %1329 = vmatprep.subr.bf16.mxu0 %v890
    %1330 = vmatpush1.bf16.msra.mxu0 %v889
    %1331 = vmatprep.subr.bf16.mxu0 %v896
    %1332 = vmatpush1.bf16.msra.mxu0 %v895
    %1333 = vmatprep.subr.bf16.mxu0 %v902
    %1334 = vmatpush1.bf16.msra.mxu0 %v901
    %1335 = vmatprep.subr.bf16.mxu0 %v908
    %1336 = vmatpush1.bf16.msra.mxu0 %v907
    %1337 = vmatprep.subr.bf16.mxu0 %v914
    %1338 = vmatpush1.bf16.msra.mxu0 %v913
    %1339 = vmatprep.subr.bf16.mxu0 %v920
    %1340 = vmatpush1.bf16.msra.mxu0 %v919
    %1341 = vmatprep.subr.bf16.mxu0 %v926
    %1342 = vmatpush1.bf16.msra.mxu0 %v925
    %1343 = vmatprep.subr.bf16.mxu0 %v932
    %1344 = vmatpush1.bf16.msra.mxu0 %v931
    %1345 = vmatprep.subr.bf16.mxu0 %v938
    %1346 = vmatpush1.bf16.msra.mxu0 %v937
    %1347 = vmatprep.subr.bf16.mxu0 %v944
    %1348 = vmatpush1.bf16.msra.mxu0 %v943
    %1349 = vmatprep.mubr.bf16.mxu0 %v268
    %1350 = vmatmul.mubr.bf16.gmra.mrb[0].mxu0 %v267
    %v1351 = vpop.f32.mrb[0].mxu0
    %v1352 = vadd.f32 %v242, %v1351
    %v1353 = vpop.f32.mrb[0].mxu0
    %v1354 = vadd.f32 %v246, %v1353
    %v1355 = vpop.f32.mrb[0].mxu0
    %v1356 = vpop.f32.mrb[0].mxu0
    %1357 = vdwg.mxu0
    %1358 = vmatprep.subr.bf16.mxu0 %v950
    %1359 = vmatpush1.bf16.msra.mxu0 %v949
    %1360 = vmatprep.subr.bf16.mxu0 %v956
    %1361 = vmatpush1.bf16.msra.mxu0 %v955
    %1362 = vmatprep.subr.bf16.mxu0 %v962
    %1363 = vmatpush1.bf16.msra.mxu0 %v961
    %1364 = vmatprep.subr.bf16.mxu0 %v968
    %1365 = vmatpush1.bf16.msra.mxu0 %v967
    %1366 = vmatprep.subr.bf16.mxu0 %v974
    %1367 = vmatpush1.bf16.msra.mxu0 %v973
    %1368 = vmatprep.subr.bf16.mxu0 %v980
    %1369 = vmatpush1.bf16.msra.mxu0 %v979
    %1370 = vmatprep.subr.bf16.mxu0 %v986
    %1371 = vmatpush1.bf16.msra.mxu0 %v985
    %1372 = vmatprep.subr.bf16.mxu0 %v992
    %1373 = vmatpush1.bf16.msra.mxu0 %v991
    %1374 = vmatprep.subr.bf16.mxu0 %v998
    %1375 = vmatpush1.bf16.msra.mxu0 %v997
    %1376 = vmatprep.subr.bf16.mxu0 %v1004
    %1377 = vmatpush1.bf16.msra.mxu0 %v1003
    %1378 = vmatprep.subr.bf16.mxu0 %v1010
    %1379 = vmatpush1.bf16.msra.mxu0 %v1009
    %1380 = vmatprep.subr.bf16.mxu0 %v1016
    %1381 = vmatpush1.bf16.msra.mxu0 %v1015
    %1382 = vmatprep.subr.bf16.mxu0 %v1022
    %1383 = vmatpush1.bf16.msra.mxu0 %v1021
    %1384 = vmatprep.subr.bf16.mxu0 %v1028
    %1385 = vmatpush1.bf16.msra.mxu0 %v1027
    %1386 = vmatprep.subr.bf16.mxu0 %v1034
    %1387 = vmatpush1.bf16.msra.mxu0 %v1033
    %1388 = vmatprep.subr.bf16.mxu0 %v1040
    %1389 = vmatpush1.bf16.msra.mxu0 %v1039
    %1390 = vmatprep.mubr.bf16.mxu0 %v270
    %1391 = vmatmul.mubr.bf16.gmra.mrb[0].mxu0 %v269
    %v1392 = vpop.f32.mrb[0].mxu0
    %v1393 = vadd.f32 %v1352, %v1392
    %v1394 = vpop.f32.mrb[0].mxu0
    %v1395 = vadd.f32 %v1354, %v1394
    %v1396 = vpop.f32.mrb[0].mxu0
    %v1397 = vpop.f32.mrb[0].mxu0
    %1398 = vdwg.mxu0
    %1399 = vmatprep.subr.bf16.mxu0 %v856
    %1400 = vmatpush1.bf16.msra.mxu0 %v855
    %1401 = vmatprep.subr.bf16.mxu0 %v862
    %1402 = vmatpush1.bf16.msra.mxu0 %v861
    %1403 = vmatprep.subr.bf16.mxu0 %v868
    %1404 = vmatpush1.bf16.msra.mxu0 %v867
    %1405 = vmatprep.subr.bf16.mxu0 %v874
    %1406 = vmatpush1.bf16.msra.mxu0 %v873
    %1407 = vmatprep.subr.bf16.mxu0 %v880
    %1408 = vmatpush1.bf16.msra.mxu0 %v879
    %1409 = vmatprep.subr.bf16.mxu0 %v886
    %1410 = vmatpush1.bf16.msra.mxu0 %v885
    %1411 = vmatprep.subr.bf16.mxu0 %v892
    %1412 = vmatpush1.bf16.msra.mxu0 %v891
    %1413 = vmatprep.subr.bf16.mxu0 %v898
    %1414 = vmatpush1.bf16.msra.mxu0 %v897
    %1415 = vmatprep.subr.bf16.mxu0 %v904
    %1416 = vmatpush1.bf16.msra.mxu0 %v903
    %1417 = vmatprep.subr.bf16.mxu0 %v910
    %1418 = vmatpush1.bf16.msra.mxu0 %v909
    %1419 = vmatprep.subr.bf16.mxu0 %v916
    %1420 = vmatpush1.bf16.msra.mxu0 %v915
    %1421 = vmatprep.subr.bf16.mxu0 %v922
    %1422 = vmatpush1.bf16.msra.mxu0 %v921
    %1423 = vmatprep.subr.bf16.mxu0 %v928
    %1424 = vmatpush1.bf16.msra.mxu0 %v927
    %1425 = vmatprep.subr.bf16.mxu0 %v934
    %1426 = vmatpush1.bf16.msra.mxu0 %v933
    %1427 = vmatprep.subr.bf16.mxu0 %v940
    %1428 = vmatpush1.bf16.msra.mxu0 %v939
    %1429 = vmatprep.subr.bf16.mxu0 %v946
    %1430 = vmatpush1.bf16.msra.mxu0 %v945
    %1431 = vmatprep.mubr.bf16.mxu0 %v268
    %1432 = vmatmul.mubr.bf16.gmra.mrb[0].mxu0 %v267
    %v1433 = vpop.f32.mrb[0].mxu0
    %v1434 = vadd.f32 %v250, %v1433
    %v1435 = vpop.f32.mrb[0].mxu0
    %v1436 = vadd.f32 %v254, %v1435
    %v1437 = vpop.f32.mrb[0].mxu0
    %v1438 = vpop.f32.mrb[0].mxu0
    %1439 = vdwg.mxu0
    %1440 = vmatprep.subr.bf16.mxu0 %v952
    %1441 = vmatpush1.bf16.msra.mxu0 %v951
    %1442 = vmatprep.subr.bf16.mxu0 %v958
    %1443 = vmatpush1.bf16.msra.mxu0 %v957
    %1444 = vmatprep.subr.bf16.mxu0 %v964
    %1445 = vmatpush1.bf16.msra.mxu0 %v963
    %1446 = vmatprep.subr.bf16.mxu0 %v970
    %1447 = vmatpush1.bf16.msra.mxu0 %v969
    %1448 = vmatprep.subr.bf16.mxu0 %v976
    %1449 = vmatpush1.bf16.msra.mxu0 %v975
    %1450 = vmatprep.subr.bf16.mxu0 %v982
    %1451 = vmatpush1.bf16.msra.mxu0 %v981
    %1452 = vmatprep.subr.bf16.mxu0 %v988
    %1453 = vmatpush1.bf16.msra.mxu0 %v987
    %1454 = vmatprep.subr.bf16.mxu0 %v994
    %1455 = vmatpush1.bf16.msra.mxu0 %v993
    %1456 = vmatprep.subr.bf16.mxu0 %v1000
    %1457 = vmatpush1.bf16.msra.mxu0 %v999
    %1458 = vmatprep.subr.bf16.mxu0 %v1006
    %1459 = vmatpush1.bf16.msra.mxu0 %v1005
    %1460 = vmatprep.subr.bf16.mxu0 %v1012
    %1461 = vmatpush1.bf16.msra.mxu0 %v1011
    %1462 = vmatprep.subr.bf16.mxu0 %v1018
    %1463 = vmatpush1.bf16.msra.mxu0 %v1017
    %1464 = vmatprep.subr.bf16.mxu0 %v1024
    %1465 = vmatpush1.bf16.msra.mxu0 %v1023
    %1466 = vmatprep.subr.bf16.mxu0 %v1030
    %1467 = vmatpush1.bf16.msra.mxu0 %v1029
    %1468 = vmatprep.subr.bf16.mxu0 %v1036
    %1469 = vmatpush1.bf16.msra.mxu0 %v1035
    %1470 = vmatprep.subr.bf16.mxu0 %v1042
    %1471 = vmatpush1.bf16.msra.mxu0 %v1041
    %1472 = vmatprep.mubr.bf16.mxu0 %v270
    %1473 = vmatmul.mubr.bf16.gmra.mrb[0].mxu0 %v269
    %v1474 = vpop.f32.mrb[0].mxu0
    %v1475 = vadd.f32 %v1434, %v1474
    %v1476 = vpop.f32.mrb[0].mxu0
    %v1477 = vadd.f32 %v1436, %v1476
    %v1478 = vpop.f32.mrb[0].mxu0
    %v1479 = vpop.f32.mrb[0].mxu0
    %1480 = vdwg.mxu0
    %v1481 = vld [vmem:[%s1] sm:$0xff]
    %v1482 = vld [vmem:[%s1 + $0x8] sm:$0xff]
    %v1483 = vld [vmem:[%s1 + $0x10] sm:$0xff]
    %v1484 = vld [vmem:[%s1 + $0x18] sm:$0xff]
    %v1485 = vld [vmem:[%s1 + $0x20] sm:$0xff]
    %v1486 = vld [vmem:[%s1 + $0x28] sm:$0xff]
    %v1487 = vld [vmem:[%s1 + $0x30] sm:$0xff]
    %v1488 = vld [vmem:[%s1 + $0x38] sm:$0xff]
    %v1489 = vld [vmem:[%s1 + $0x40] sm:$0xff]
    %v1490 = vld [vmem:[%s1 + $0x48] sm:$0xff]
    %v1491 = vld [vmem:[%s1 + $0x50] sm:$0xff]
    %v1492 = vld [vmem:[%s1 + $0x58] sm:$0xff]
    %v1493 = vld [vmem:[%s4] sm:$0xff]
    %v1494 = vld [vmem:[%s4 + $0x8] sm:$0xff]
    %v1495 = vld [vmem:[%s4 + $0x10] sm:$0xff]
    %v1496 = vld [vmem:[%s4 + $0x18] sm:$0xff]
    %v1497 = vld [vmem:[%s4 + $0x20] sm:$0xff]
    %v1498 = vld [vmem:[%s4 + $0x28] sm:$0xff]
    %v1499 = vld [vmem:[%s4 + $0x30] sm:$0xff]
    %v1500 = vld [vmem:[%s4 + $0x38] sm:$0xff]
    %v1501 = vld [vmem:[%s4 + $0x40] sm:$0xff]
    %v1502 = vld [vmem:[%s4 + $0x48] sm:$0xff]
    %v1503 = vld [vmem:[%s4 + $0x50] sm:$0xff]
    %v1504 = vld [vmem:[%s4 + $0x58] sm:$0xff]
    %v1505 = vld [vmem:[%s4 + $0x60] sm:$0xff]
    %v1506 = vld [vmem:[%s4 + $0x68] sm:$0xff]
    %v1507 = vld [vmem:[%s4 + $0x70] sm:$0xff]
    %v1508 = vld [vmem:[%s4 + $0x78] sm:$0xff]
    %vm1509 = vcmask 523264
    %v1511 = vsel %vm1509, %v1481, 0
    %v1514 = vsel %vm1509, %v1482, 0
    %v1517 = vsel %vm1509, %v1483, 0
    %v1520 = vsel %vm1509, %v1484, 0
    %v1523 = vsel %vm1509, %v1485, 0
    %v1526 = vsel %vm1509, %v1486, 0
    %v1529 = vsel %vm1509, %v1487, 0
    %v1532 = vsel %vm1509, %v1488, 0
    %v1535 = vsel %vm1509, %v1489, 0
    %v1538 = vsel %vm1509, %v1490, 0
    %v1541 = vsel %vm1509, %v1491, 0
    %v1544 = vsel %vm1509, %v1492, 0
    %1546 = vmatprep.subr.mxu0 %v1494
    %1547 = vmatpush1.msra.mxu0 %v1493
    %1548 = vmatprep.subr.mxu0 %v1496
    %1549 = vmatpush1.msra.mxu0 %v1495
    %1550 = vmatprep.subr.mxu0 %v1498
    %1551 = vmatpush1.msra.mxu0 %v1497
    %1552 = vmatprep.subr.mxu0 %v1500
    %1553 = vmatpush1.msra.mxu0 %v1499
    %1554 = vmatprep.subr.mxu0 %v1502
    %1555 = vmatpush1.msra.mxu0 %v1501
    %1556 = vmatprep.subr.mxu0 %v1504
    %1557 = vmatpush1.msra.mxu0 %v1503
    %1558 = vmatprep.subr.mxu0 %v1506
    %1559 = vmatpush1.msra.mxu0 %v1505
    %1560 = vmatprep.subr.mxu0 %v1508
    %1561 = vmatpush1.msra.mxu0 %v1507
    %1562 = vmatprep.subr.mxu0 0.0
    %1563 = vmatpush1.msra.mxu0 0.0
    %1564 = vmatprep.subr.mxu0 0.0
    %1565 = vmatpush1.msra.mxu0 0.0
    %1566 = vmatprep.subr.mxu0 0.0
    %1567 = vmatpush1.msra.mxu0 0.0
    %1568 = vmatprep.subr.mxu0 0.0
    %1569 = vmatpush1.msra.mxu0 0.0
    %1570 = vmatprep.subr.mxu0 0.0
    %1571 = vmatpush1.msra.mxu0 0.0
    %1572 = vmatprep.subr.mxu0 0.0
    %1573 = vmatpush1.msra.mxu0 0.0
    %1574 = vmatprep.subr.mxu0 0.0
    %1575 = vmatpush1.msra.mxu0 0.0
    %1576 = vmatprep.subr.mxu0 0.0
    %1577 = vmatpush1.msra.mxu0 0.0
    %1578 = vmatprep.subr.mxu0 0.0
    %1579 = vmatpush1.msra.mxu0 0.0
    %1580 = vmatprep.subr.mxu0 0.0
    %1581 = vmatpush1.msra.mxu0 0.0
    %1582 = vmatprep.subr.mxu0 0.0
    %1583 = vmatpush1.msra.mxu0 0.0
    %1584 = vmatprep.subr.mxu0 0.0
    %1585 = vmatpush1.msra.mxu0 0.0
    %1586 = vmatprep.subr.mxu0 0.0
    %1587 = vmatpush1.msra.mxu0 0.0
    %1588 = vmatprep.subr.mxu0 0.0
    %1589 = vmatpush1.msra.mxu0 0.0
    %1590 = vmatprep.subr.mxu0 0.0
    %1591 = vmatpush1.msra.mxu0 0.0
    %1592 = vmatprep.subr.mxu0 0.0
    %1593 = vmatpush1.msra.mxu0 0.0
    %1594 = vmatprep.subr.mxu0 0.0
    %1595 = vmatpush1.msra.mxu0 0.0
    %1596 = vmatprep.subr.mxu0 0.0
    %1597 = vmatpush1.msra.mxu0 0.0
    %1598 = vmatprep.subr.mxu0 0.0
    %1599 = vmatpush1.msra.mxu0 0.0
    %1600 = vmatprep.subr.mxu0 0.0
    %1601 = vmatpush1.msra.mxu0 0.0
    %1602 = vmatprep.subr.mxu0 0.0
    %1603 = vmatpush1.msra.mxu0 0.0
    %1604 = vmatprep.subr.mxu0 0.0
    %1605 = vmatpush1.msra.mxu0 0.0
    %1606 = vmatprep.subr.mxu0 0.0
    %1607 = vmatpush1.msra.mxu0 0.0
    %1608 = vmatprep.subr.mxu0 0.0
    %1609 = vmatpush1.msra.mxu0 0.0
    %1610 = vmatprep.mubr.f32.mxu0 0.0
    %1611 = vmatmul.mubr.f32.gmra.mrb[0].mxu0 %v1511
    %v1612 = vpop.f32.mrb[0].mxu0
    %v1613 = vadd.f32 0.0, %v1612
    %v1614 = vpop.f32.mrb[0].mxu0
    %v1615 = vadd.f32 0.0, %v1614
    %1616 = vmatprep.mubr.f32.mxu0 0.0
    %1617 = vmatmul.mubr.f32.gmra.mrb[0].mxu0 %v1514
    %v1618 = vpop.f32.mrb[0].mxu0
    %v1619 = vadd.f32 0.0, %v1618
    %v1620 = vpop.f32.mrb[0].mxu0
    %v1621 = vadd.f32 0.0, %v1620
    %1622 = vmatprep.mubr.f32.mxu0 0.0
    %1623 = vmatmul.mubr.f32.gmra.mrb[0].mxu0 %v1517
    %v1624 = vpop.f32.mrb[0].mxu0
    %v1625 = vadd.f32 0.0, %v1624
    %v1626 = vpop.f32.mrb[0].mxu0
    %v1627 = vadd.f32 0.0, %v1626
    %1628 = vmatprep.mubr.f32.mxu0 0.0
    %1629 = vmatmul.mubr.f32.gmra.mrb[0].mxu0 %v1520
    %v1630 = vpop.f32.mrb[0].mxu0
    %v1631 = vadd.f32 0.0, %v1630
    %v1632 = vpop.f32.mrb[0].mxu0
    %v1633 = vadd.f32 0.0, %v1632
    %1634 = vmatprep.mubr.f32.mxu0 0.0
    %1635 = vmatmul.mubr.f32.gmra.mrb[0].mxu0 %v1523
    %v1636 = vpop.f32.mrb[0].mxu0
    %v1637 = vadd.f32 0.0, %v1636
    %v1638 = vpop.f32.mrb[0].mxu0
    %v1639 = vadd.f32 0.0, %v1638
    %1640 = vmatprep.mubr.f32.mxu0 0.0
    %1641 = vmatmul.mubr.f32.gmra.mrb[0].mxu0 %v1526
    %v1642 = vpop.f32.mrb[0].mxu0
    %v1643 = vadd.f32 0.0, %v1642
    %v1644 = vpop.f32.mrb[0].mxu0
    %v1645 = vadd.f32 0.0, %v1644
    %1646 = vmatprep.mubr.f32.mxu0 0.0
    %1647 = vmatmul.mubr.f32.gmra.mrb[0].mxu0 %v1529
    %v1648 = vpop.f32.mrb[0].mxu0
    %v1649 = vadd.f32 0.0, %v1648
    %v1650 = vpop.f32.mrb[0].mxu0
    %v1651 = vadd.f32 0.0, %v1650
    %1652 = vmatprep.mubr.f32.mxu0 0.0
    %1653 = vmatmul.mubr.f32.gmra.mrb[0].mxu0 %v1532
    %v1654 = vpop.f32.mrb[0].mxu0
    %v1655 = vadd.f32 0.0, %v1654
    %v1656 = vpop.f32.mrb[0].mxu0
    %v1657 = vadd.f32 0.0, %v1656
    %1658 = vmatprep.mubr.f32.mxu0 0.0
    %1659 = vmatmul.mubr.f32.gmra.mrb[0].mxu0 %v1535
    %v1660 = vpop.f32.mrb[0].mxu0
    %v1661 = vadd.f32 0.0, %v1660
    %v1662 = vpop.f32.mrb[0].mxu0
    %v1663 = vadd.f32 0.0, %v1662
    %1664 = vmatprep.mubr.f32.mxu0 0.0
    %1665 = vmatmul.mubr.f32.gmra.mrb[0].mxu0 %v1538
    %v1666 = vpop.f32.mrb[0].mxu0
    %v1667 = vadd.f32 0.0, %v1666
    %v1668 = vpop.f32.mrb[0].mxu0
    %v1669 = vadd.f32 0.0, %v1668
    %1670 = vmatprep.mubr.f32.mxu0 0.0
    %1671 = vmatmul.mubr.f32.gmra.mrb[0].mxu0 %v1541
    %v1672 = vpop.f32.mrb[0].mxu0
    %v1673 = vadd.f32 0.0, %v1672
    %v1674 = vpop.f32.mrb[0].mxu0
    %v1675 = vadd.f32 0.0, %v1674
    %1676 = vmatprep.mubr.f32.mxu0 0.0
    %1677 = vmatmul.mubr.f32.gmra.mrb[0].mxu0 %v1544
    %v1678 = vpop.f32.mrb[0].mxu0
    %v1679 = vadd.f32 0.0, %v1678
    %v1680 = vpop.f32.mrb[0].mxu0
    %v1681 = vadd.f32 0.0, %v1680
    %1682 = vdwg.mxu0
    %v1683 = vmul.f32 %v1613, %v1311
    %v1684 = vmul.f32 %v1615, %v1313
    %v1685 = vmul.f32 %v1619, %v1311
    %v1686 = vmul.f32 %v1621, %v1313
    %v1687 = vmul.f32 %v1625, %v1311
    %v1688 = vmul.f32 %v1627, %v1313
    %v1689 = vmul.f32 %v1631, %v1393
    %v1690 = vmul.f32 %v1633, %v1395
    %v1691 = vmul.f32 %v1637, %v1393
    %v1692 = vmul.f32 %v1639, %v1395
    %v1693 = vmul.f32 %v1643, %v1393
    %v1694 = vmul.f32 %v1645, %v1395
    %v1695 = vadd.f32 %v1683, %v1689
    %v1696 = vadd.f32 %v1684, %v1690
    %v1697 = vadd.f32 %v1685, %v1691
    %v1698 = vadd.f32 %v1686, %v1692
    %v1699 = vadd.f32 %v1687, %v1693
    %v1700 = vadd.f32 %v1688, %v1694
    %v1701 = vmul.f32 %v1649, %v1475
    %v1702 = vmul.f32 %v1651, %v1477
    %v1703 = vmul.f32 %v1655, %v1475
    %v1704 = vmul.f32 %v1657, %v1477
    %v1705 = vmul.f32 %v1661, %v1475
    %v1706 = vmul.f32 %v1663, %v1477
    %v1707 = vadd.f32 %v1695, %v1701
    %v1708 = vadd.f32 %v1696, %v1702
    %v1709 = vadd.f32 %v1697, %v1703
    %v1710 = vadd.f32 %v1698, %v1704
    %v1711 = vadd.f32 %v1699, %v1705
    %v1712 = vadd.f32 %v1700, %v1706
    %v1713 = vadd.f32 %v1707, %v1667
    %v1714 = vadd.f32 %v1708, %v1669
    %v1715 = vadd.f32 %v1709, %v1673
    %v1716 = vadd.f32 %v1710, %v1675
    %v1717 = vadd.f32 %v1711, %v1679
    %v1718 = vadd.f32 %v1712, %v1681
    %1719 = vst [vmem:[#allocation5] sm:$0xff] %v1713
    %1720 = vst [vmem:[#allocation5 + $0x8] sm:$0xff] %v1714
    %1721 = vst [vmem:[#allocation5 + $0x10] sm:$0xff] %v1715
    %1722 = vst [vmem:[#allocation5 + $0x18] sm:$0xff] %v1716
    %1723 = vst [vmem:[#allocation5 + $0x20] sm:$0xff] %v1717
    %1724 = vst [vmem:[#allocation5 + $0x28] sm:$0xff] %v1718
    // Predicated region
    $region26: #{lbs_pallas.1} parent=1 // pred_check
      _
    $region27: #{lbs_pallas.1} parent=1 // pred_check_branch
      %1726 = sbr.rel (0) target = $region29
    $region28: #{lbs_pallas.1} parent=1 // pred_region
      %s1728 = ssub.s32 768, 768
      %1729 = vsyncadd [#allocation4], %s1728
      %s1730 = sshll.u32 [#allocation5], 4
      %s1731 = int_to_ptr.vmem [resolvable:$true] %s1730
      %1736 = dma.vmem_to_hbm [thread:$0]  %s1731, 768, %s5, [#allocation4], 256, 256, 16
    $region29: #{lbs_pallas.1} parent=1 // pred_fallthru
      _
    // Predicated region
    $region30: #{lbs_pallas.1} parent=1 // pred_check
      _
    $region31: #{lbs_pallas.1} parent=1 // pred_check_branch
      %1738 = sbr.rel (0) target = $region33
    $region32: #{lbs_pallas.1} parent=1 // pred_region
      %1739 = dma.done [#allocation4], 768
    $region33: #{lbs_pallas.1} parent=1 // pred_fallthru
      _
    %1740 = vsyncpa [#allocation3], 1
    %1741 = vsyncpa [#allocation4], 1

</llo_original>
